<compile_context>
chip_gen: v5e
topology: v5e:2x2
jax: 0.10.0
libtpu: 0.0.40
codegen_flags: <defaults>
</compile_context>

<pallas_src>
import functools

import jax
import jax.numpy as jnp
from jax.experimental import pallas as pl
from jax.experimental.pallas import tpu as pltpu


def _round_up(x, m):
    return (x + m - 1) // m * m


def _cdiv(a, b):
    return (a + b - 1) // b


def _vmem_capacity_bytes():
    try:
        return int(pltpu.get_tpu_info().vmem_capacity_bytes)
    except Exception:
        return 64 * 1024 * 1024  # conservative fallback (v7x per-TC VMEM)


def _choose_row_tile(M, tm_desired, min_steps=4):
    """Row tile (multiple of 8): keep >= min_steps grid steps when M allows (pipelining + both
    v7x TCs), and derive the tile from the actual M so ragged shapes don't over-pad."""
    max_steps = max(_round_up(M, 8) // 8, 1)
    steps = max(_cdiv(M, max(tm_desired, 8)), 1)
    steps = min(max(steps, min_steps), max_steps)
    return _round_up(_cdiv(M, steps), 8)


def _choose_ff_tile(d_ff, t_ff):
    """d_ff chunk: must divide d_ff and be a multiple of 128 (or be the full d_ff)."""
    if t_ff is None:
        t_ff = min(d_ff, 2048)
    if t_ff >= d_ff:
        return d_ff
    t_ff = max(128, (t_ff // 128) * 128)
    while t_ff > 128 and d_ff % t_ff != 0:
        t_ff -= 128
    if d_ff % t_ff != 0 or t_ff % 128 != 0:
        return d_ff
    return t_ff


def _ffn_kernel(x_ref, w1_ref, b1_ref, w2_ref, b2_ref, gamma_ref, beta_ref,
                o_ref, acc_ref):
    k = pl.program_id(1)

    @pl.when(k == 0)
    def _init():
        acc_ref[...] = jnp.zeros_like(acc_ref)

    x = x_ref[...]                                               # (tm, d_model) bf16

    # conv1 (1x1) == linear over d_model (full contraction); ReLU is exact per d_ff chunk.
    h = jnp.dot(x, w1_ref[...], preferred_element_type=jnp.float32) + b1_ref[...]
    h = jnp.maximum(h, 0.0)                                      # (tm, t_ff) f32

    # conv2 (1x1): partial contraction over this d_ff chunk, accumulate in f32.
    acc_ref[...] += jnp.dot(h.astype(w2_ref.dtype), w2_ref[...],
                            preferred_element_type=jnp.float32)

    @pl.when(k == pl.num_programs(1) - 1)
    def _epilogue():
        # Residual add in f32 (x is the bf16-quantized activation).
        y = acc_ref[...] + b2_ref[...] + x.astype(jnp.float32)   # (tm, d_model) f32
        d = y.shape[-1]
        # Independent cross-lane reductions (overlap on the XLUs): var = E[y^2] - mean^2.
        s1 = jnp.sum(y, axis=-1, keepdims=True)
        s2 = jnp.sum(y * y, axis=-1, keepdims=True)
        mean = s1 * (1.0 / d)
        var = s2 * (1.0 / d) - mean * mean
        inv = jax.lax.rsqrt(var + 1e-5)                          # EUP slot
        scale = inv * gamma_ref[...]                             # fold gamma into the scale
        shift = beta_ref[...] - mean * scale
        o_ref[...] = (y * scale + shift).astype(o_ref.dtype)


@functools.partial(jax.jit, static_argnames=("tm", "t_ff", "single_buffer_weights"))
def poswise_ffn(x, w1, b1, w2, b2, gamma, beta, *, tm=512, t_ff=None,
                single_buffer_weights=None):
    """x: [B, L, d_model] -> [B, L, d_model] (bf16 output).
    w1: (d_model, d_ff), w2: (d_ff, d_model) -- pass already in bf16 (cast once at init)."""
    B, L, d_model = x.shape
    d_ff = w1.shape[1]
    M = B * L

    tm_eff = _choose_row_tile(M, tm)
    M_pad = _round_up(M, tm_eff)
    t_ff_eff = _choose_ff_tile(d_ff, t_ff)
    nk = d_ff // t_ff_eff
    n_row_tiles = M_pad // tm_eff

    # Activations cross the HBM boundary in bf16 (in and out); math inside stays f32 where it
    # matters (accumulation, residual, LayerNorm).
    x2d = x.reshape(M, d_model).astype(jnp.bfloat16)
    if M_pad != M:
        x2d = jnp.pad(x2d, ((0, M_pad - M), (0, 0)))

    b1_2d = b1.reshape(1, d_ff).astype(jnp.float32)
    b2_2d = b2.reshape(1, d_model).astype(jnp.float32)
    g_2d = gamma.reshape(1, d_model).astype(jnp.float32)
    be_2d = beta.reshape(1, d_model).astype(jnp.float32)

    w_bytes = jnp.dtype(w1.dtype).itemsize
    vmem_cap = _vmem_capacity_bytes()

    if single_buffer_weights is None:
        # Weights have a constant index only when d_ff is not chunked; single-buffer them when a
        # double-buffered copy would eat >25% of VMEM (the v7x 64 MiB case).  When d_ff is
        # chunked, keep double-buffering so chunk DMAs overlap compute.
        single_buffer_weights = (
            nk == 1 and 2 * 2 * d_model * t_ff_eff * w_bytes > vmem_cap // 4)
    w_kwargs = dict(pipeline_mode=pl.Buffered(1)) if single_buffer_weights else {}
    w_bufs = 1 if single_buffer_weights else 2

    # VMEM footprint estimate -> scoped limit (with headroom, clamped below physical capacity).
    est = (2 * tm_eff * d_model * 2                      # x tiles (bf16, double-buffered)
           + 2 * tm_eff * d_model * 2                    # out tiles (bf16, double-buffered)
           + w_bufs * d_model * t_ff_eff * w_bytes       # W1 chunk(s)
           + w_bufs * t_ff_eff * d_model * w_bytes       # W2 chunk(s)
           + 2 * (t_ff_eff + 3 * d_model) * 4            # biases / LN params
           + tm_eff * d_model * 4                        # f32 accumulator scratch
           + tm_eff * t_ff_eff * (4 + w_bytes))          # h (f32) + its matmul-input copy
    vmem_limit = max(16 << 20, min(int(est * 1.5) + (8 << 20), int(vmem_cap * 0.85)))

    weight_fetches = 1 if nk == 1 else n_row_tiles
    cost = pl.CostEstimate(
        flops=2 * 2 * M_pad * d_model * d_ff,                    # two matmuls
        transcendentals=M_pad,                                   # one rsqrt per row
        bytes_accessed=(2 * M_pad * d_model * 2                  # x in + out (bf16)
                        + weight_fetches * 2 * d_model * d_ff * w_bytes
                        + (d_ff + 3 * d_model) * 4),
    )

    out2d = pl.pallas_call(
        _ffn_kernel,
        out_shape=jax.ShapeDtypeStruct((M_pad, d_model), jnp.bfloat16),
        grid_spec=pltpu.PrefetchScalarGridSpec(
            num_scalar_prefetch=0,
            grid=(n_row_tiles, nk),
            in_specs=[
                pl.BlockSpec((tm_eff, d_model), lambda i, k: (i, 0)),               # x rows
                pl.BlockSpec((d_model, t_ff_eff), lambda i, k: (0, k), **w_kwargs), # W1 chunk
                pl.BlockSpec((1, t_ff_eff), lambda i, k: (0, k)),                   # b1 chunk
                pl.BlockSpec((t_ff_eff, d_model), lambda i, k: (k, 0), **w_kwargs), # W2 chunk
                pl.BlockSpec((1, d_model), lambda i, k: (0, 0)),                    # b2
                pl.BlockSpec((1, d_model), lambda i, k: (0, 0)),                    # gamma
                pl.BlockSpec((1, d_model), lambda i, k: (0, 0)),                    # beta
            ],
            out_specs=pl.BlockSpec((tm_eff, d_model), lambda i, k: (i, 0)),
            scratch_shapes=[pltpu.VMEM((tm_eff, d_model), jnp.float32)],
        ),
        compiler_params=pltpu.CompilerParams(
            dimension_semantics=("parallel", "arbitrary"),
            vmem_limit_bytes=vmem_limit,
        ),
        cost_estimate=cost,
    )(x2d, w1, b1_2d, w2, b2_2d, g_2d, be_2d)

    return out2d[:M].reshape(B, L, d_model)


def _reference_matched(x, w1, b1, w2, b2, gamma, beta, eps=1e-5):
    """Pure-JAX reference matching the kernel's precision: bf16 activations/weights into the
    matmuls, f32 accumulation, f32 residual + LayerNorm."""
    f32 = jnp.float32
    bf = lambda a: a.astype(jnp.bfloat16).astype(f32)
    B, L, d_model = x.shape
    x2 = bf(x.reshape(-1, d_model))
    hp = jax.lax.Precision.HIGHEST
    h = jnp.maximum(jnp.dot(x2, bf(w1), precision=hp) + b1.astype(f32), 0.0)
    y = jnp.dot(bf(h), bf(w2), precision=hp) + b2.astype(f32) + x2
    mean = jnp.mean(y, axis=-1, keepdims=True)
    var = jnp.mean((y - mean) ** 2, axis=-1, keepdims=True)
    out = (y - mean) * jax.lax.rsqrt(var + eps) * gamma.astype(f32) + beta.astype(f32)
    return out.reshape(B, L, d_model)


if __name__ == "__main__":
    # TPU-tile-friendly small shapes: M = B*L = 1024 rows -> 4 row tiles of 256 at tm=512.
    d_model, d_ff = 128, 512
    B, L = 2, 512

    key = jax.random.PRNGKey(0)
    kx, kw1, kb1, kw2, kb2 = jax.random.split(key, 5)

    x = jax.random.normal(kx, (B, L, d_model), dtype=jnp.float32)
    # Conv1d weights (out, in, 1) -> stored transposed as (in, out) for x @ W.
    w1 = jax.random.normal(kw1, (d_model, d_ff), dtype=jnp.float32) * 0.05
    b1 = jax.random.normal(kb1, (d_ff,), dtype=jnp.float32) * 0.05
    w2 = jax.random.normal(kw2, (d_ff, d_model), dtype=jnp.float32) * 0.05
    b2 = jax.random.normal(kb2, (d_model,), dtype=jnp.float32) * 0.05
    gamma = jnp.ones((d_model,), dtype=jnp.float32)
    beta = jnp.zeros((d_model,), dtype=jnp.float32)

    # Cast weights to bf16 ONCE at "parameter init" time (outside the jitted wrapper).
    w1_bf = w1.astype(jnp.bfloat16)
    w2_bf = w2.astype(jnp.bfloat16)

    ref = _reference_matched(x, w1_bf, b1, w2_bf, b2, gamma, beta)

    # 1) Default path: d_ff resident (single k step), 4 parallel row tiles.
    out = poswise_ffn(x, w1_bf, b1, w2_bf, b2, gamma, beta)
    jax.block_until_ready(out)
    assert out.shape == (B, L, d_model)
    assert jnp.allclose(out.astype(jnp.float32), ref, atol=6e-2, rtol=3e-2), "mismatch (default)"

    # 2) d_ff chunked along the k axis (accumulator + LN epilogue) -- the v7x production path.
    out_k = poswise_ffn(x, w1_bf, b1, w2_bf, b2, gamma, beta, t_ff=128)
    jax.block_until_ready(out_k)
    assert jnp.allclose(out_k.astype(jnp.float32), ref, atol=6e-2, rtol=3e-2), "mismatch (k-tiled)"

    # 3) Ragged row count (M = 200) exercises the bounded-padding path.
    x_r = jax.random.normal(jax.random.PRNGKey(1), (2, 100, d_model), dtype=jnp.float32)
    out_r = poswise_ffn(x_r, w1_bf, b1, w2_bf, b2, gamma, beta, tm=128)
    jax.block_until_ready(out_r)
    ref_r = _reference_matched(x_r, w1_bf, b1, w2_bf, b2, gamma, beta)
    assert out_r.shape == x_r.shape
    assert jnp.allclose(out_r.astype(jnp.float32), ref_r, atol=6e-2, rtol=3e-2), "mismatch (ragged)"

    print("KERNEL_OK")
</pallas_src>

<mosaic_0001>
module attributes {stable_mosaic.version = 11 : i64} {
  func.func @_ffn_kernel(%arg0: i32, %arg1: i32, %arg2: memref<256x128xbf16, #tpu.memory_space<vmem>>, %arg3: memref<128x512xbf16, #tpu.memory_space<vmem>>, %arg4: memref<1x512xf32, #tpu.memory_space<vmem>>, %arg5: memref<512x128xbf16, #tpu.memory_space<vmem>>, %arg6: memref<1x128xf32, #tpu.memory_space<vmem>>, %arg7: memref<1x128xf32, #tpu.memory_space<vmem>>, %arg8: memref<1x128xf32, #tpu.memory_space<vmem>>, %arg9: memref<256x128xbf16, #tpu.memory_space<vmem>>, %arg10: memref<256x128xf32, #tpu.memory_space<vmem>>) attributes {dimension_semantics = [#tpu.dimension_semantics<parallel>, #tpu.dimension_semantics<arbitrary>], iteration_bounds = array<i64: 4, 1>, scalar_prefetch = 0 : i64, scratch_operands = 1 : i64, tpu.core_type = #tpu.core_type<tc>, window_params = [{transform_indices = @transform_0, window_bounds = array<i64: 256, 128>}, {transform_indices = @transform_1, window_bounds = array<i64: 128, 512>}, {transform_indices = @transform_2, window_bounds = array<i64: 1, 512>}, {transform_indices = @transform_3, window_bounds = array<i64: 512, 128>}, {pipeline_mode = #tpu.pipeline_mode<synchronous>, transform_indices = @transform_4, window_bounds = array<i64: 1, 128>}, {pipeline_mode = #tpu.pipeline_mode<synchronous>, transform_indices = @transform_5, window_bounds = array<i64: 1, 128>}, {pipeline_mode = #tpu.pipeline_mode<synchronous>, transform_indices = @transform_6, window_bounds = array<i64: 1, 128>}, {transform_indices = @transform_7, window_bounds = array<i64: 256, 128>}]} {
    %c0_i32 = arith.constant 0 : i32
    %0 = arith.cmpi eq, %arg1, %c0_i32 : i32
    %1 = arith.extui %0 : i1 to i32
    %c0_i32_0 = arith.constant 0 : i32
    %2 = arith.cmpi ne, %1, %c0_i32_0 : i32
    scf.if %2 {
      %cst_16 = arith.constant 0.000000e+00 : f32
      %20 = vector.broadcast %cst_16 : f32 to vector<256x128xf32>
      %c0_17 = arith.constant 0 : index
      %c0_18 = arith.constant 0 : index
      %21 = vector.load %arg10[%c0_17, %c0_18] : memref<256x128xf32, #tpu.memory_space<vmem>>, vector<256x128xf32>
      tpu.vector_store %arg10[%c0_17, %c0_18], %20 {strides = array<i32>} : memref<256x128xf32, #tpu.memory_space<vmem>>, vector<256x128xf32>,
    } else {
    }
    %c0 = arith.constant 0 : index
    %c0_1 = arith.constant 0 : index
    %3 = vector.load %arg2[%c0, %c0_1] : memref<256x128xbf16, #tpu.memory_space<vmem>>, vector<256x128xbf16>
    %c0_2 = arith.constant 0 : index
    %c0_3 = arith.constant 0 : index
    %4 = vector.load %arg3[%c0_2, %c0_3] : memref<128x512xbf16, #tpu.memory_space<vmem>>, vector<128x512xbf16>
    %cst = arith.constant dense<0.000000e+00> : vector<256x512xf32>
    %5 = tpu.matmul %3, %4, %cst {dimension_numbers = #tpu.dot_dimension_numbers<[1], [0], [0], [1], [0, 0, 1, 1], [], []>} : vector<256x128xbf16>, vector<128x512xbf16>, vector<256x512xf32> -> vector<256x512xf32>
    %c0_4 = arith.constant 0 : index
    %c0_5 = arith.constant 0 : index
    %6 = vector.load %arg4[%c0_4, %c0_5] : memref<1x512xf32, #tpu.memory_space<vmem>>, vector<1x512xf32>
    %7 = vector.broadcast %6 : vector<1x512xf32> to vector<256x512xf32>
    %8 = arith.addf %5, %7 : vector<256x512xf32>
    %cst_6 = arith.constant 0.000000e+00 : f32
    %9 = vector.broadcast %cst_6 : f32 to vector<256x512xf32>
    %10 = arith.maximumf %8, %9 : vector<256x512xf32>
    %c0_7 = arith.constant 0 : index
    %c0_8 = arith.constant 0 : index
    %11 = vector.load %arg10[%c0_7, %c0_8] : memref<256x128xf32, #tpu.memory_space<vmem>>, vector<256x128xf32>
    %12 = arith.truncf %10 : vector<256x512xf32> to vector<256x512xbf16>
    %c0_9 = arith.constant 0 : index
    %c0_10 = arith.constant 0 : index
    %13 = vector.load %arg5[%c0_9, %c0_10] : memref<512x128xbf16, #tpu.memory_space<vmem>>, vector<512x128xbf16>
    %cst_11 = arith.constant dense<0.000000e+00> : vector<256x128xf32>
    %14 = tpu.matmul %12, %13, %cst_11 {dimension_numbers = #tpu.dot_dimension_numbers<[1], [0], [0], [1], [0, 0, 1, 1], [], []>} : vector<256x512xbf16>, vector<512x128xbf16>, vector<256x128xf32> -> vector<256x128xf32>
    %15 = arith.addf %11, %14 : vector<256x128xf32>
    %c0_12 = arith.constant 0 : index
    %c0_13 = arith.constant 0 : index
    %16 = vector.load %arg10[%c0_12, %c0_13] : memref<256x128xf32, #tpu.memory_space<vmem>>, vector<256x128xf32>
    tpu.vector_store %arg10[%c0_12, %c0_13], %15 {strides = array<i32>} : memref<256x128xf32, #tpu.memory_space<vmem>>, vector<256x128xf32>,
    %c0_i32_14 = arith.constant 0 : i32
    %17 = arith.cmpi eq, %arg1, %c0_i32_14 : i32
    %18 = arith.extui %17 : i1 to i32
    %c0_i32_15 = arith.constant 0 : i32
    %19 = arith.cmpi ne, %18, %c0_i32_15 : i32
    scf.if %19 {
      %c0_16 = arith.constant 0 : index
      %c0_17 = arith.constant 0 : index
      %20 = vector.load %arg10[%c0_16, %c0_17] : memref<256x128xf32, #tpu.memory_space<vmem>>, vector<256x128xf32>
      %c0_18 = arith.constant 0 : index
      %c0_19 = arith.constant 0 : index
      %21 = vector.load %arg6[%c0_18, %c0_19] : memref<1x128xf32, #tpu.memory_space<vmem>>, vector<1x128xf32>
      %22 = vector.broadcast %21 : vector<1x128xf32> to vector<256x128xf32>
      %23 = arith.addf %20, %22 : vector<256x128xf32>
      %24 = arith.extf %3 : vector<256x128xbf16> to vector<256x128xf32>
      %25 = arith.addf %23, %24 : vector<256x128xf32>
      %cst_20 = arith.constant dense<0.000000e+00> : vector<256xf32>
      %26 = vector.multi_reduction <add>, %25, %cst_20 [1] : vector<256x128xf32> to vector<256xf32>
      %27 = vector.shape_cast %26 : vector<256xf32> to vector<256x1xf32>
      %28 = arith.mulf %25, %25 : vector<256x128xf32>
      %cst_21 = arith.constant dense<0.000000e+00> : vector<256xf32>
      %29 = vector.multi_reduction <add>, %28, %cst_21 [1] : vector<256x128xf32> to vector<256xf32>
      %30 = vector.shape_cast %29 : vector<256xf32> to vector<256x1xf32>
      %cst_22 = arith.constant 7.812500e-03 : f32
      %31 = vector.broadcast %cst_22 : f32 to vector<256x1xf32>
      %32 = arith.mulf %27, %31 : vector<256x1xf32>
      %cst_23 = arith.constant 7.812500e-03 : f32
      %33 = vector.broadcast %cst_23 : f32 to vector<256x1xf32>
      %34 = arith.mulf %30, %33 : vector<256x1xf32>
      %35 = arith.mulf %32, %32 : vector<256x1xf32>
      %36 = arith.subf %34, %35 : vector<256x1xf32>
      %cst_24 = arith.constant 9.99999974E-6 : f32
      %37 = vector.broadcast %cst_24 : f32 to vector<256x1xf32>
      %38 = arith.addf %36, %37 : vector<256x1xf32>
      %39 = math.rsqrt %38 : vector<256x1xf32>
      %c0_25 = arith.constant 0 : index
      %c0_26 = arith.constant 0 : index
      %40 = vector.load %arg7[%c0_25, %c0_26] : memref<1x128xf32, #tpu.memory_space<vmem>>, vector<1x128xf32>
      %41 = vector.broadcast %39 : vector<256x1xf32> to vector<256x128xf32>
      %42 = vector.broadcast %40 : vector<1x128xf32> to vector<256x128xf32>
      %43 = arith.mulf %41, %42 : vector<256x128xf32>
      %c0_27 = arith.constant 0 : index
      %c0_28 = arith.constant 0 : index
      %44 = vector.load %arg8[%c0_27, %c0_28] : memref<1x128xf32, #tpu.memory_space<vmem>>, vector<1x128xf32>
      %45 = vector.broadcast %32 : vector<256x1xf32> to vector<256x128xf32>
      %46 = arith.mulf %45, %43 : vector<256x128xf32>
      %47 = vector.broadcast %44 : vector<1x128xf32> to vector<256x128xf32>
      %48 = arith.subf %47, %46 : vector<256x128xf32>
      %49 = arith.mulf %25, %43 : vector<256x128xf32>
      %50 = arith.addf %49, %48 : vector<256x128xf32>
      %51 = arith.truncf %50 : vector<256x128xf32> to vector<256x128xbf16>
      %c0_29 = arith.constant 0 : index
      %c0_30 = arith.constant 0 : index
      %52 = vector.load %arg9[%c0_29, %c0_30] : memref<256x128xbf16, #tpu.memory_space<vmem>>, vector<256x128xbf16>
      tpu.vector_store %arg9[%c0_29, %c0_30], %51 {strides = array<i32>} : memref<256x128xbf16, #tpu.memory_space<vmem>>, vector<256x128xbf16>,
    } else {
    }
    return
  }
  func.func @transform_0(%arg0: i32, %arg1: i32) -> (i32, i32) {
    %c0_i32 = arith.constant 0 : i32
    %c0_i32_0 = arith.constant 0 : i32
    return %arg0, %c0_i32 : i32, i32
  }
  func.func @transform_1(%arg0: i32, %arg1: i32) -> (i32, i32) {
    %c0_i32 = arith.constant 0 : i32
    %c0_i32_0 = arith.constant 0 : i32
    return %c0_i32, %arg1 : i32, i32
  }
  func.func @transform_2(%arg0: i32, %arg1: i32) -> (i32, i32) {
    %c0_i32 = arith.constant 0 : i32
    %c0_i32_0 = arith.constant 0 : i32
    return %c0_i32, %arg1 : i32, i32
  }
  func.func @transform_3(%arg0: i32, %arg1: i32) -> (i32, i32) {
    %c0_i32 = arith.constant 0 : i32
    %c0_i32_0 = arith.constant 0 : i32
    return %arg1, %c0_i32 : i32, i32
  }
  func.func @transform_4(%arg0: i32, %arg1: i32) -> (i32, i32) {
    %c0_i32 = arith.constant 0 : i32
    %c0_i32_0 = arith.constant 0 : i32
    %c0_i32_1 = arith.constant 0 : i32
    return %c0_i32, %c0_i32_0 : i32, i32
  }
  func.func @transform_5(%arg0: i32, %arg1: i32) -> (i32, i32) {
    %c0_i32 = arith.constant 0 : i32
    %c0_i32_0 = arith.constant 0 : i32
    %c0_i32_1 = arith.constant 0 : i32
    return %c0_i32, %c0_i32_0 : i32, i32
  }
  func.func @transform_6(%arg0: i32, %arg1: i32) -> (i32, i32) {
    %c0_i32 = arith.constant 0 : i32
    %c0_i32_0 = arith.constant 0 : i32
    %c0_i32_1 = arith.constant 0 : i32
    return %c0_i32, %c0_i32_0 : i32, i32
  }
  func.func @transform_7(%arg0: i32, %arg1: i32) -> (i32, i32) {
    %c0_i32 = arith.constant 0 : i32
    %c0_i32_0 = arith.constant 0 : i32
    return %arg0, %c0_i32 : i32, i32
  }
}

</mosaic_0001>

<llo_original>
// kernel: poswise_ffn.1
$region0: #{poswise_ffn.1}
  #allocation0 [shape = 'u32[]', space=smem, size = 0x4, offset = 0x4, fixed_abs, tag = 'smem constant byte address 0x4 - core index']
  #allocation1 [shape = 'u32[72,128]{1,0:T(1,128)}', space=vmem, size = 0x9000, scoped, tag = 'internal scratch']
  #allocation2 [shape = 'f32[256,128]{1,0:T(8,128)}', space=vmem, size = 0x20000, scoped, tag = 'scratch operand']
  %s0 = inlined_call_operand.vmem [shape: bf16[1024,128], index: 0, kind: input, shape index: {}]
  %s1 = inlined_call_operand.vmem [shape: bf16[128,512], index: 1, kind: input, shape index: {}]
  %s2 = inlined_call_operand.vmem [shape: f32[1,512], index: 2, kind: input, shape index: {}]
  %s3 = inlined_call_operand.vmem [shape: bf16[512,128], index: 3, kind: input, shape index: {}]
  %s4 = inlined_call_operand.vmem [shape: f32[1,128], index: 4, kind: input, shape index: {}]
  %s5 = inlined_call_operand.vmem [shape: f32[1,128], index: 5, kind: input, shape index: {}]
  %s6 = inlined_call_operand.vmem [shape: f32[1,128], index: 6, kind: input, shape index: {}]
  %s7 = inlined_call_operand.hbm [shape: bf16[1024,128], index: 7, kind: output, shape index: {}]
  %s8 = sld [smem:[#allocation0]]
  $region69: #{poswise_ffn.1} parent=0
    _
  %s10 = ssub.s32 1, %s8
  %s11 = scalar_select 0, %s10, %s8
  $region1: #{poswise_ffn.1} parent=0
    #allocation3 [shape = 'u8[131072]{0}', space=vmem, size = 0x20000, scoped, tag = 'output window, operand 0']
    #allocation4 [shape = 's32[2]{0}', space=sflag, size = 0x8, scoped, tag = 'scoped memory for poswise_ffn.1']
    %12 = vsyncpa [#allocation4], 0
    %s13 = scalar_lea.sflag [#allocation4], 1
    %14 = vsyncpa %s13, 0
    loop: start=0, step=1, limit=6
    $region2: #{poswise_ffn.1} parent=1 // loop_pre_header
      _
    $region3: #{poswise_ffn.1} parent=1 // loop_header
      %s16 = sphi 0, %s20
      %p17 = scmp.ge.s32.totalorder %s16, 6
      %s23 = sphi 0, %s35
      %s24 = sphi 0, %s31
      %s25 = sphi 0, %s23
      %s26 = sphi 0, %s24
      %s27 = sphi 0, %s25
      %s28 = sphi 0, %s26
      %s38 = sphi 0, %s40
      %s41 = sphi 0, %s38
      %s42 = sphi 0, %s41
      %s58 = sphi 0, %s42
      %s64 = sphi 0, %s66
      %s67 = sphi 0, %s64
      %s68 = sphi 0, %s67
      %s84 = sphi 0, %s68
      %s90 = sphi 0, %s92
      %s93 = sphi 0, %s90
      %s94 = sphi 0, %s93
      %s110 = sphi 0, %s94
      %s116 = sphi 0, %s118
      %s119 = sphi 0, %s116
      %s120 = sphi 0, %s119
      %s136 = sphi 0, %s120
      %s140 = sphi 0, %s140
      %s142 = sphi 0, %s140
      %s143 = sphi 0, %s142
      %s157 = sphi 0, %s143
      %s161 = sphi 0, %s161
      %s163 = sphi 0, %s161
      %s164 = sphi 0, %s163
      %s178 = sphi 0, %s164
      %s182 = sphi 0, %s182
      %s184 = sphi 0, %s182
      %s185 = sphi 0, %s184
      %s199 = sphi 0, %s185
      %s205 = sphi 0, %s207
      %s208 = sphi 0, %s205
      %s209 = sphi 0, %s208
      %s225 = sphi 0, %s209
    $region4: #{poswise_ffn.1} parent=1 // loop_header_branch
      %19 = sbr.rel (%p17) target = $region8
    $region5: #{poswise_ffn.1} parent=1 // loop_body
      %s21 = ssub.s32 %s16, 1
      %s22 = ssub.s32 %s16, 2
      %s29 = sadd.s32 1, %s24
      %p30 = scmp.ge.s32.totalorder %s29, 1
      %s31 = scalar_select %p30, 0, %s29
      %s32 = sadd.s32 1, %s23
      %s33 = scalar_select %p30, %s32, %s23
      %p34 = scmp.ge.s32.totalorder %s33, 4
      %s35 = scalar_select %p34, 0, %s33
      %s36 = ssub.s32 %s23, %s35
      %p37 = scmp.eq.s32.totalorder %s36, 0
      %s39 = sadd.s32 %s38, 1
      %s40 = scalar_select %p37, %s38, %s39
      %p43 = pneg %p37
      %p44 = scmp.eq.s32.totalorder %s16, 3
      %p45 = por %p43, %p44
      %p46 = scmp.ne.s32.totalorder %s38, %s41
      %p47 = scmp.eq.s32.totalorder %s16, 0
      %p48 = por %p46, %p47
      %p49 = scmp.ne.s32.totalorder %s38, %s41
      %p50 = scmp.eq.s32.totalorder %s21, 3
      %p51 = por %p49, %p50
      %p52 = scmp.ne.s32.totalorder %s41, %s42
      %p53 = scmp.eq.s32.totalorder %s21, 0
      %p54 = por %p52, %p53
      %p55 = scmp.ne.s32.totalorder %s41, %s42
      %p56 = scmp.eq.s32.totalorder %s22, 3
      %p57 = por %p55, %p56
      %p59 = scmp.ne.s32.totalorder %s42, %s58
      %p60 = scmp.eq.s32.totalorder %s22, 0
      %p61 = por %p59, %p60
      %s62 = ssub.s32 %s24, %s31
      %p63 = scmp.eq.s32.totalorder %s62, 0
      %s65 = sadd.s32 %s64, 1
      %s66 = scalar_select %p63, %s64, %s65
      %p69 = pneg %p63
      %p70 = scmp.eq.s32.totalorder %s16, 3
      %p71 = por %p69, %p70
      %p72 = scmp.ne.s32.totalorder %s64, %s67
      %p73 = scmp.eq.s32.totalorder %s16, 0
      %p74 = por %p72, %p73
      %p75 = scmp.ne.s32.totalorder %s64, %s67
      %p76 = scmp.eq.s32.totalorder %s21, 3
      %p77 = por %p75, %p76
      %p78 = scmp.ne.s32.totalorder %s67, %s68
      %p79 = scmp.eq.s32.totalorder %s21, 0
      %p80 = por %p78, %p79
      %p81 = scmp.ne.s32.totalorder %s67, %s68
      %p82 = scmp.eq.s32.totalorder %s22, 3
      %p83 = por %p81, %p82
      %p85 = scmp.ne.s32.totalorder %s68, %s84
      %p86 = scmp.eq.s32.totalorder %s22, 0
      %p87 = por %p85, %p86
      %s88 = ssub.s32 %s24, %s31
      %p89 = scmp.eq.s32.totalorder %s88, 0
      %s91 = sadd.s32 %s90, 1
      %s92 = scalar_select %p89, %s90, %s91
      %p95 = pneg %p89
      %p96 = scmp.eq.s32.totalorder %s16, 3
      %p97 = por %p95, %p96
      %p98 = scmp.ne.s32.totalorder %s90, %s93
      %p99 = scmp.eq.s32.totalorder %s16, 0
      %p100 = por %p98, %p99
      %p101 = scmp.ne.s32.totalorder %s90, %s93
      %p102 = scmp.eq.s32.totalorder %s21, 3
      %p103 = por %p101, %p102
      %p104 = scmp.ne.s32.totalorder %s93, %s94
      %p105 = scmp.eq.s32.totalorder %s21, 0
      %p106 = por %p104, %p105
      %p107 = scmp.ne.s32.totalorder %s93, %s94
      %p108 = scmp.eq.s32.totalorder %s22, 3
      %p109 = por %p107, %p108
      %p111 = scmp.ne.s32.totalorder %s94, %s110
      %p112 = scmp.eq.s32.totalorder %s22, 0
      %p113 = por %p111, %p112
      %s114 = ssub.s32 %s24, %s31
      %p115 = scmp.eq.s32.totalorder %s114, 0
      %s117 = sadd.s32 %s116, 1
      %s118 = scalar_select %p115, %s116, %s117
      %p121 = pneg %p115
      %p122 = scmp.eq.s32.totalorder %s16, 3
      %p123 = por %p121, %p122
      %p124 = scmp.ne.s32.totalorder %s116, %s119
      %p125 = scmp.eq.s32.totalorder %s16, 0
      %p126 = por %p124, %p125
      %p127 = scmp.ne.s32.totalorder %s116, %s119
      %p128 = scmp.eq.s32.totalorder %s21, 3
      %p129 = por %p127, %p128
      %p130 = scmp.ne.s32.totalorder %s119, %s120
      %p131 = scmp.eq.s32.totalorder %s21, 0
      %p132 = por %p130, %p131
      %p133 = scmp.ne.s32.totalorder %s119, %s120
      %p134 = scmp.eq.s32.totalorder %s22, 3
      %p135 = por %p133, %p134
      %p137 = scmp.ne.s32.totalorder %s120, %s136
      %p138 = scmp.eq.s32.totalorder %s22, 0
      %p139 = por %p137, %p138
      %s141 = sadd.s32 %s140, 1
      %p144 = scmp.eq.s32.totalorder %s16, 3
      %p145 = scmp.ne.s32.totalorder %s140, %s142
      %p146 = scmp.eq.s32.totalorder %s16, 0
      %p147 = por %p145, %p146
      %p148 = scmp.ne.s32.totalorder %s140, %s142
      %p149 = scmp.eq.s32.totalorder %s21, 3
      %p150 = por %p148, %p149
      %p151 = scmp.ne.s32.totalorder %s142, %s143
      %p152 = scmp.eq.s32.totalorder %s21, 0
      %p153 = por %p151, %p152
      %p154 = scmp.ne.s32.totalorder %s142, %s143
      %p155 = scmp.eq.s32.totalorder %s22, 3
      %p156 = por %p154, %p155
      %p158 = scmp.ne.s32.totalorder %s143, %s157
      %p159 = scmp.eq.s32.totalorder %s22, 0
      %p160 = por %p158, %p159
      %s162 = sadd.s32 %s161, 1
      %p165 = scmp.eq.s32.totalorder %s16, 3
      %p166 = scmp.ne.s32.totalorder %s161, %s163
      %p167 = scmp.eq.s32.totalorder %s16, 0
      %p168 = por %p166, %p167
      %p169 = scmp.ne.s32.totalorder %s161, %s163
      %p170 = scmp.eq.s32.totalorder %s21, 3
      %p171 = por %p169, %p170
      %p172 = scmp.ne.s32.totalorder %s163, %s164
      %p173 = scmp.eq.s32.totalorder %s21, 0
      %p174 = por %p172, %p173
      %p175 = scmp.ne.s32.totalorder %s163, %s164
      %p176 = scmp.eq.s32.totalorder %s22, 3
      %p177 = por %p175, %p176
      %p179 = scmp.ne.s32.totalorder %s164, %s178
      %p180 = scmp.eq.s32.totalorder %s22, 0
      %p181 = por %p179, %p180
      %s183 = sadd.s32 %s182, 1
      %p186 = scmp.eq.s32.totalorder %s16, 3
      %p187 = scmp.ne.s32.totalorder %s182, %s184
      %p188 = scmp.eq.s32.totalorder %s16, 0
      %p189 = por %p187, %p188
      %p190 = scmp.ne.s32.totalorder %s182, %s184
      %p191 = scmp.eq.s32.totalorder %s21, 3
      %p192 = por %p190, %p191
      %p193 = scmp.ne.s32.totalorder %s184, %s185
      %p194 = scmp.eq.s32.totalorder %s21, 0
      %p195 = por %p193, %p194
      %p196 = scmp.ne.s32.totalorder %s184, %s185
      %p197 = scmp.eq.s32.totalorder %s22, 3
      %p198 = por %p196, %p197
      %p200 = scmp.ne.s32.totalorder %s185, %s199
      %p201 = scmp.eq.s32.totalorder %s22, 0
      %p202 = por %p200, %p201
      %s203 = ssub.s32 %s23, %s35
      %p204 = scmp.eq.s32.totalorder %s203, 0
      %s206 = sadd.s32 %s205, 1
      %s207 = scalar_select %p204, %s205, %s206
      %p210 = pneg %p204
      %p211 = scmp.eq.s32.totalorder %s16, 3
      %p212 = por %p210, %p211
      %p213 = scmp.ne.s32.totalorder %s205, %s208
      %p214 = scmp.eq.s32.totalorder %s16, 0
      %p215 = por %p213, %p214
      %p216 = scmp.ne.s32.totalorder %s205, %s208
      %p217 = scmp.eq.s32.totalorder %s21, 3
      %p218 = por %p216, %p217
      %p219 = scmp.ne.s32.totalorder %s208, %s209
      %p220 = scmp.eq.s32.totalorder %s21, 0
      %p221 = por %p219, %p220
      %p222 = scmp.ne.s32.totalorder %s208, %s209
      %p223 = scmp.eq.s32.totalorder %s22, 3
      %p224 = por %p222, %p223
      %p226 = scmp.ne.s32.totalorder %s209, %s225
      %p227 = scmp.eq.s32.totalorder %s22, 0
      %p228 = por %p226, %p227
      %p229 = scmp.le.s32.totalorder 1, %s16
      %p230 = scmp.lt.s32.totalorder %s16, 5
      %p231 = pnand %p229, %p230
      %p232 = pneg %p231
      // Predicated region
      $region9: #{poswise_ffn.1} parent=5 // pred_check
        _
      $region10: #{poswise_ffn.1} parent=5 // pred_check_branch
        %234 = sbr.rel (%p231) target = $region12
      $region11: #{poswise_ffn.1} parent=5 // pred_region
        %s235 = ssub.s32 %s16, 1
        // Predicated region
        $region13: #{poswise_ffn.1} parent=11 // pred_check
          %p236 = pneg %p80
        $region14: #{poswise_ffn.1} parent=11 // pred_check_branch
          %238 = sbr.rel (%p236) target = $region16
        $region15: #{poswise_ffn.1} parent=11 // pred_region
          %s239 = smul.u32 4, %s26
          %p240 = scmp.lt.s32.totalorder %s239, 3
          %s241 = scalar_select %p240, %s239, 3
          %s242 = smul.addr %s241, 4
          %s243 = scalar_lea.vmem %s1, %s242
          %s244 = smul.u32 4, %s26
        $region16: #{poswise_ffn.1} parent=11 // pred_fallthru
          _
        // Predicated region
        $region17: #{poswise_ffn.1} parent=11 // pred_check
          %p245 = pneg %p106
        $region18: #{poswise_ffn.1} parent=11 // pred_check_branch
          %247 = sbr.rel (%p245) target = $region20
        $region19: #{poswise_ffn.1} parent=11 // pred_region
          %s248 = smul.u32 4, %s26
          %p249 = scmp.lt.s32.totalorder %s248, 3
          %s250 = scalar_select %p249, %s248, 3
          %s251 = scalar_lea.vmem %s2, %s250
          %s252 = smul.u32 4, %s26
        $region20: #{poswise_ffn.1} parent=11 // pred_fallthru
          _
        // Predicated region
        $region21: #{poswise_ffn.1} parent=11 // pred_check
          %p253 = pneg %p132
        $region22: #{poswise_ffn.1} parent=11 // pred_check_branch
          %255 = sbr.rel (%p253) target = $region24
        $region23: #{poswise_ffn.1} parent=11 // pred_region
          %s256 = smul.u32 64, %s26
          %p257 = scmp.lt.s32.totalorder %s256, 63
          %s258 = scalar_select %p257, %s256, 63
          %s259 = smul.addr %s258, 4
          %s260 = scalar_lea.vmem %s3, %s259
          %s261 = smul.u32 64, %s26
        $region24: #{poswise_ffn.1} parent=11 // pred_fallthru
          _
        // Predicated region
        $region25: #{poswise_ffn.1} parent=11 // pred_check
          %p262 = pneg %p153
        $region26: #{poswise_ffn.1} parent=11 // pred_check_branch
          %264 = sbr.rel (%p262) target = $region28
        $region27: #{poswise_ffn.1} parent=11 // pred_region
          _
        $region28: #{poswise_ffn.1} parent=11 // pred_fallthru
          _
        // Predicated region
        $region29: #{poswise_ffn.1} parent=11 // pred_check
          %p265 = pneg %p174
        $region30: #{poswise_ffn.1} parent=11 // pred_check_branch
          %267 = sbr.rel (%p265) target = $region32
        $region31: #{poswise_ffn.1} parent=11 // pred_region
          _
        $region32: #{poswise_ffn.1} parent=11 // pred_fallthru
          _
        // Predicated region
        $region33: #{poswise_ffn.1} parent=11 // pred_check
          %p268 = pneg %p195
        $region34: #{poswise_ffn.1} parent=11 // pred_check_branch
          %270 = sbr.rel (%p268) target = $region36
        $region35: #{poswise_ffn.1} parent=11 // pred_region
          _
        $region36: #{poswise_ffn.1} parent=11 // pred_fallthru
          _
      $region12: #{poswise_ffn.1} parent=5 // pred_fallthru
        _
      %p271 = scmp.lt.s32.totalorder %s16, 4
      // Predicated region
      $region37: #{poswise_ffn.1} parent=5 // pred_check
        %p272 = pneg %p271
      $region38: #{poswise_ffn.1} parent=5 // pred_check_branch
        %274 = sbr.rel (%p272) target = $region40
      $region39: #{poswise_ffn.1} parent=5 // pred_region
        // Predicated region
        $region41: #{poswise_ffn.1} parent=39 // pred_check
          %p275 = pneg %p48
        $region42: #{poswise_ffn.1} parent=39 // pred_check_branch
          %277 = sbr.rel (%p275) target = $region44
        $region43: #{poswise_ffn.1} parent=39 // pred_region
          %s278 = smul.u32 32, %s23
          %p279 = scmp.lt.s32.totalorder %s278, 127
          %s280 = scalar_select %p279, %s278, 127
          %s281 = smul.addr %s280, 4
          %s282 = scalar_lea.vmem %s0, %s281
          %s283 = smul.u32 32, %s23
        $region44: #{poswise_ffn.1} parent=39 // pred_fallthru
          _
      $region40: #{poswise_ffn.1} parent=5 // pred_fallthru
        _
      %p284 = scmp.le.s32.totalorder 1, %s16
      %p285 = scmp.lt.s32.totalorder %s16, 5
      %p286 = pnand %p284, %p285
      %p287 = pneg %p286
      // Predicated region
      $region45: #{poswise_ffn.1} parent=5 // pred_check
        _
      $region46: #{poswise_ffn.1} parent=5 // pred_check_branch
        %289 = sbr.rel (%p286) target = $region48
      $region47: #{poswise_ffn.1} parent=5 // pred_region
        %s290 = ssub.s32 %s16, 1
        %s291 = smul.u32 32, %s25
        %p292 = scmp.lt.s32.totalorder %s291, 127
        %s293 = scalar_select %p292, %s291, 127
        %s294 = smul.addr %s293, 4
        %s295 = scalar_lea.vmem %s0, %s294
        %p296 = pneg %p54
        %p297 = pneg %p51
        %s298 = smul.u32 4, %s26
        %p299 = scmp.lt.s32.totalorder %s298, 3
        %s300 = scalar_select %p299, %s298, 3
        %s301 = smul.addr %s300, 4
        %s302 = scalar_lea.vmem %s1, %s301
        %p303 = pneg %p80
        %p304 = pneg %p77
        %s305 = smul.u32 4, %s26
        %p306 = scmp.lt.s32.totalorder %s305, 3
        %s307 = scalar_select %p306, %s305, 3
        %s308 = scalar_lea.vmem %s2, %s307
        %p309 = pneg %p106
        %p310 = pneg %p103
        %s311 = smul.u32 64, %s26
        %p312 = scmp.lt.s32.totalorder %s311, 63
        %s313 = scalar_select %p312, %s311, 63
        %s314 = smul.addr %s313, 4
        %s315 = scalar_lea.vmem %s3, %s314
        %p316 = pneg %p132
        %p317 = pneg %p129
        %p318 = pneg %p153
        %p319 = pneg %p150
        %p320 = pneg %p174
        %p321 = pneg %p171
        %p322 = pneg %p195
        %p323 = pneg %p192
        %p324 = pneg %p221
        %p325 = pneg %p218
        %s326 = sand.u32 %s208, 1
        %s327 = scalar_lea.sflag [#allocation4], %s326
        %s328 = sand.u32 %s208, 1
        %s329 = smul.addr %s328, 128
        %s330 = scalar_lea.vmem [#allocation3], %s329
        %s331 = smul.u32 32, %s25
        %p332 = scmp.lt.s32.totalorder %s331, 127
        %s333 = scalar_select %p332, %s331, 127
        %s334 = smul.addr %s333, 4
        %s335 = scalar_lea.vmem %s0, %s334
        %s336 = smul.u32 32, %s25
        %s337 = smul.u32 4, %s26
        %p338 = scmp.lt.s32.totalorder %s337, 3
        %s339 = scalar_select %p338, %s337, 3
        %s340 = smul.addr %s339, 4
        %s341 = scalar_lea.vmem %s1, %s340
        %s342 = smul.u32 4, %s26
        %s343 = smul.u32 4, %s26
        %p344 = scmp.lt.s32.totalorder %s343, 3
        %s345 = scalar_select %p344, %s343, 3
        %s346 = scalar_lea.vmem %s2, %s345
        %s347 = smul.u32 4, %s26
        %s348 = smul.u32 64, %s26
        %p349 = scmp.lt.s32.totalorder %s348, 63
        %s350 = scalar_select %p349, %s348, 63
        %s351 = smul.addr %s350, 4
        %s352 = scalar_lea.vmem %s3, %s351
        %s353 = smul.u32 64, %s26
        %s354 = smul.u32 32, %s25
        %p355 = scmp.eq.s32.totalorder %s26, 0
        // Predicated region
        $region49: #{poswise_ffn.1} parent=47 // pred_check
          %p356 = pneg %p355
        $region50: #{poswise_ffn.1} parent=47 // pred_check_branch
          %358 = sbr.rel (%p356) target = $region52
        $region51: #{poswise_ffn.1} parent=47 // pred_region
          %359 = vst [vmem:[#allocation2] sm:$0xff] 0.0
          %360 = vst [vmem:[#allocation2 + $0x8] sm:$0xff] 0.0
          %361 = vst [vmem:[#allocation2 + $0x10] sm:$0xff] 0.0
          %362 = vst [vmem:[#allocation2 + $0x18] sm:$0xff] 0.0
          %363 = vst [vmem:[#allocation2 + $0x20] sm:$0xff] 0.0
          %364 = vst [vmem:[#allocation2 + $0x28] sm:$0xff] 0.0
          %365 = vst [vmem:[#allocation2 + $0x30] sm:$0xff] 0.0
          %366 = vst [vmem:[#allocation2 + $0x38] sm:$0xff] 0.0
          %367 = vst [vmem:[#allocation2 + $0x40] sm:$0xff] 0.0
          %368 = vst [vmem:[#allocation2 + $0x48] sm:$0xff] 0.0
          %369 = vst [vmem:[#allocation2 + $0x50] sm:$0xff] 0.0
          %370 = vst [vmem:[#allocation2 + $0x58] sm:$0xff] 0.0
          %371 = vst [vmem:[#allocation2 + $0x60] sm:$0xff] 0.0
          %372 = vst [vmem:[#allocation2 + $0x68] sm:$0xff] 0.0
          %373 = vst [vmem:[#allocation2 + $0x70] sm:$0xff] 0.0
          %374 = vst [vmem:[#allocation2 + $0x78] sm:$0xff] 0.0
          %375 = vst [vmem:[#allocation2 + $0x80] sm:$0xff] 0.0
          %376 = vst [vmem:[#allocation2 + $0x88] sm:$0xff] 0.0
          %377 = vst [vmem:[#allocation2 + $0x90] sm:$0xff] 0.0
          %378 = vst [vmem:[#allocation2 + $0x98] sm:$0xff] 0.0
          %379 = vst [vmem:[#allocation2 + $0xa0] sm:$0xff] 0.0
          %380 = vst [vmem:[#allocation2 + $0xa8] sm:$0xff] 0.0
          %381 = vst [vmem:[#allocation2 + $0xb0] sm:$0xff] 0.0
          %382 = vst [vmem:[#allocation2 + $0xb8] sm:$0xff] 0.0
          %383 = vst [vmem:[#allocation2 + $0xc0] sm:$0xff] 0.0
          %384 = vst [vmem:[#allocation2 + $0xc8] sm:$0xff] 0.0
          %385 = vst [vmem:[#allocation2 + $0xd0] sm:$0xff] 0.0
          %386 = vst [vmem:[#allocation2 + $0xd8] sm:$0xff] 0.0
          %387 = vst [vmem:[#allocation2 + $0xe0] sm:$0xff] 0.0
          %388 = vst [vmem:[#allocation2 + $0xe8] sm:$0xff] 0.0
          %389 = vst [vmem:[#allocation2 + $0xf0] sm:$0xff] 0.0
          %390 = vst [vmem:[#allocation2 + $0xf8] sm:$0xff] 0.0
        $region52: #{poswise_ffn.1} parent=47 // pred_fallthru
          _
        %v391 = vld [vmem:[%s335] sm:$0xf]
        %v392 = vld [vmem:[%s335 + $0x4] sm:$0xf]
        %v393 = vld [vmem:[%s335 + $0x8] sm:$0xf]
        %v394 = vld [vmem:[%s335 + $0xc] sm:$0xf]
        %v395 = vld [vmem:[%s335 + $0x10] sm:$0xf]
        %v396 = vld [vmem:[%s335 + $0x14] sm:$0xf]
        %v397 = vld [vmem:[%s335 + $0x18] sm:$0xf]
        %v398 = vld [vmem:[%s335 + $0x1c] sm:$0xf]
        %v399 = vld [vmem:[%s335 + $0x20] sm:$0xf]
        %v400 = vld [vmem:[%s335 + $0x24] sm:$0xf]
        %v401 = vld [vmem:[%s335 + $0x28] sm:$0xf]
        %v402 = vld [vmem:[%s335 + $0x2c] sm:$0xf]
        %v403 = vld [vmem:[%s335 + $0x30] sm:$0xf]
        %v404 = vld [vmem:[%s335 + $0x34] sm:$0xf]
        %v405 = vld [vmem:[%s335 + $0x38] sm:$0xf]
        %v406 = vld [vmem:[%s335 + $0x3c] sm:$0xf]
        %v407 = vld [vmem:[%s335 + $0x40] sm:$0xf]
        %v408 = vld [vmem:[%s335 + $0x44] sm:$0xf]
        %v409 = vld [vmem:[%s335 + $0x48] sm:$0xf]
        %v410 = vld [vmem:[%s335 + $0x4c] sm:$0xf]
        %v411 = vld [vmem:[%s335 + $0x50] sm:$0xf]
        %v412 = vld [vmem:[%s335 + $0x54] sm:$0xf]
        %v413 = vld [vmem:[%s335 + $0x58] sm:$0xf]
        %v414 = vld [vmem:[%s335 + $0x5c] sm:$0xf]
        %v415 = vld [vmem:[%s335 + $0x60] sm:$0xf]
        %v416 = vld [vmem:[%s335 + $0x64] sm:$0xf]
        %v417 = vld [vmem:[%s335 + $0x68] sm:$0xf]
        %v418 = vld [vmem:[%s335 + $0x6c] sm:$0xf]
        %v419 = vld [vmem:[%s335 + $0x70] sm:$0xf]
        %v420 = vld [vmem:[%s335 + $0x74] sm:$0xf]
        %v421 = vld [vmem:[%s335 + $0x78] sm:$0xf]
        %v422 = vld [vmem:[%s335 + $0x7c] sm:$0xf]
        %v423 = vld [vmem:[%s341] sm:$0xff]
        %v424 = vld [vmem:[%s341 + $0x8] sm:$0xff]
        %v425 = vld [vmem:[%s341 + $0x10] sm:$0xff]
        %v426 = vld [vmem:[%s341 + $0x18] sm:$0xff]
        %v427 = vld [vmem:[%s341 + $0x20] sm:$0xff]
        %v428 = vld [vmem:[%s341 + $0x28] sm:$0xff]
        %v429 = vld [vmem:[%s341 + $0x30] sm:$0xff]
        %v430 = vld [vmem:[%s341 + $0x38] sm:$0xff]
        %v431 = vld [vmem:[%s341 + $0x40] sm:$0xff]
        %v432 = vld [vmem:[%s341 + $0x48] sm:$0xff]
        %v433 = vld [vmem:[%s341 + $0x50] sm:$0xff]
        %v434 = vld [vmem:[%s341 + $0x58] sm:$0xff]
        %v435 = vld [vmem:[%s341 + $0x60] sm:$0xff]
        %v436 = vld [vmem:[%s341 + $0x68] sm:$0xff]
        %v437 = vld [vmem:[%s341 + $0x70] sm:$0xff]
        %v438 = vld [vmem:[%s341 + $0x78] sm:$0xff]
        %v439 = vld [vmem:[%s341 + $0x80] sm:$0xff]
        %v440 = vld [vmem:[%s341 + $0x88] sm:$0xff]
        %v441 = vld [vmem:[%s341 + $0x90] sm:$0xff]
        %v442 = vld [vmem:[%s341 + $0x98] sm:$0xff]
        %v443 = vld [vmem:[%s341 + $0xa0] sm:$0xff]
        %v444 = vld [vmem:[%s341 + $0xa8] sm:$0xff]
        %v445 = vld [vmem:[%s341 + $0xb0] sm:$0xff]
        %v446 = vld [vmem:[%s341 + $0xb8] sm:$0xff]
        %v447 = vld [vmem:[%s341 + $0xc0] sm:$0xff]
        %v448 = vld [vmem:[%s341 + $0xc8] sm:$0xff]
        %v449 = vld [vmem:[%s341 + $0xd0] sm:$0xff]
        %v450 = vld [vmem:[%s341 + $0xd8] sm:$0xff]
        %v451 = vld [vmem:[%s341 + $0xe0] sm:$0xff]
        %v452 = vld [vmem:[%s341 + $0xe8] sm:$0xff]
        %v453 = vld [vmem:[%s341 + $0xf0] sm:$0xff]
        %v454 = vld [vmem:[%s341 + $0xf8] sm:$0xff]
        %v455 = vld [vmem:[%s346] sm:$0xf]
        %v457 = vperm.slane %v455, 0
        %v458 = vperm.slane %v455, 1
        %v459 = vperm.slane %v455, 2
        %v460 = vperm.slane %v455, 3
        %v497 = vunpack.c.l.b16 %v391
        %v498 = vunpack.c.l.b16 %v392
        %v499 = vunpack.c.l.b16 %v393
        %v500 = vunpack.c.l.b16 %v394
        %v501 = vunpack.c.l.b16 %v395
        %v502 = vunpack.c.l.b16 %v396
        %v503 = vunpack.c.l.b16 %v397
        %v504 = vunpack.c.l.b16 %v398
        %v505 = vunpack.c.l.b16 %v399
        %v506 = vunpack.c.l.b16 %v400
        %v507 = vunpack.c.l.b16 %v401
        %v508 = vunpack.c.l.b16 %v402
        %v509 = vunpack.c.l.b16 %v403
        %v510 = vunpack.c.l.b16 %v404
        %v511 = vunpack.c.l.b16 %v405
        %v512 = vunpack.c.l.b16 %v406
        %v513 = vunpack.c.l.b16 %v407
        %v514 = vunpack.c.l.b16 %v408
        %v515 = vunpack.c.l.b16 %v409
        %v516 = vunpack.c.l.b16 %v410
        %v517 = vunpack.c.l.b16 %v411
        %v518 = vunpack.c.l.b16 %v412
        %v519 = vunpack.c.l.b16 %v413
        %v520 = vunpack.c.l.b16 %v414
        %v521 = vunpack.c.l.b16 %v415
        %v522 = vunpack.c.l.b16 %v416
        %v523 = vunpack.c.l.b16 %v417
        %v524 = vunpack.c.l.b16 %v418
        %v525 = vunpack.c.l.b16 %v419
        %v526 = vunpack.c.l.b16 %v420
        %v527 = vunpack.c.l.b16 %v421
        %v528 = vunpack.c.l.b16 %v422
        %v529 = vpack.c.b16 %v498, %v497
        %v530 = vpack.c.b16 %v500, %v499
        %v531 = vpack.c.b16 %v502, %v501
        %v532 = vpack.c.b16 %v504, %v503
        %v533 = vpack.c.b16 %v506, %v505
        %v534 = vpack.c.b16 %v508, %v507
        %v535 = vpack.c.b16 %v510, %v509
        %v536 = vpack.c.b16 %v512, %v511
        %v537 = vpack.c.b16 %v514, %v513
        %v538 = vpack.c.b16 %v516, %v515
        %v539 = vpack.c.b16 %v518, %v517
        %v540 = vpack.c.b16 %v520, %v519
        %v541 = vpack.c.b16 %v522, %v521
        %v542 = vpack.c.b16 %v524, %v523
        %v543 = vpack.c.b16 %v526, %v525
        %v544 = vpack.c.b16 %v528, %v527
        %v593 = vunpack.c.l.b16 %v423
        %v594 = vunpack.c.h.b16 %v423
        %v595 = vunpack.c.l.b16 %v424
        %v596 = vunpack.c.h.b16 %v424
        %v597 = vunpack.c.l.b16 %v425
        %v598 = vunpack.c.h.b16 %v425
        %v599 = vunpack.c.l.b16 %v426
        %v600 = vunpack.c.h.b16 %v426
        %v601 = vunpack.c.l.b16 %v427
        %v602 = vunpack.c.h.b16 %v427
        %v603 = vunpack.c.l.b16 %v428
        %v604 = vunpack.c.h.b16 %v428
        %v605 = vunpack.c.l.b16 %v429
        %v606 = vunpack.c.h.b16 %v429
        %v607 = vunpack.c.l.b16 %v430
        %v608 = vunpack.c.h.b16 %v430
        %v609 = vunpack.c.l.b16 %v431
        %v610 = vunpack.c.h.b16 %v431
        %v611 = vunpack.c.l.b16 %v432
        %v612 = vunpack.c.h.b16 %v432
        %v613 = vunpack.c.l.b16 %v433
        %v614 = vunpack.c.h.b16 %v433
        %v615 = vunpack.c.l.b16 %v434
        %v616 = vunpack.c.h.b16 %v434
        %v617 = vunpack.c.l.b16 %v435
        %v618 = vunpack.c.h.b16 %v435
        %v619 = vunpack.c.l.b16 %v436
        %v620 = vunpack.c.h.b16 %v436
        %v621 = vunpack.c.l.b16 %v437
        %v622 = vunpack.c.h.b16 %v437
        %v623 = vunpack.c.l.b16 %v438
        %v624 = vunpack.c.h.b16 %v438
        %v625 = vunpack.c.l.b16 %v439
        %v626 = vunpack.c.h.b16 %v439
        %v627 = vunpack.c.l.b16 %v440
        %v628 = vunpack.c.h.b16 %v440
        %v629 = vunpack.c.l.b16 %v441
        %v630 = vunpack.c.h.b16 %v441
        %v631 = vunpack.c.l.b16 %v442
        %v632 = vunpack.c.h.b16 %v442
        %v633 = vunpack.c.l.b16 %v443
        %v634 = vunpack.c.h.b16 %v443
        %v635 = vunpack.c.l.b16 %v444
        %v636 = vunpack.c.h.b16 %v444
        %v637 = vunpack.c.l.b16 %v445
        %v638 = vunpack.c.h.b16 %v445
        %v639 = vunpack.c.l.b16 %v446
        %v640 = vunpack.c.h.b16 %v446
        %v641 = vunpack.c.l.b16 %v447
        %v642 = vunpack.c.h.b16 %v447
        %v643 = vunpack.c.l.b16 %v448
        %v644 = vunpack.c.h.b16 %v448
        %v645 = vunpack.c.l.b16 %v449
        %v646 = vunpack.c.h.b16 %v449
        %v647 = vunpack.c.l.b16 %v450
        %v648 = vunpack.c.h.b16 %v450
        %v649 = vunpack.c.l.b16 %v451
        %v650 = vunpack.c.h.b16 %v451
        %v651 = vunpack.c.l.b16 %v452
        %v652 = vunpack.c.h.b16 %v452
        %v653 = vunpack.c.l.b16 %v453
        %v654 = vunpack.c.h.b16 %v453
        %v655 = vunpack.c.l.b16 %v454
        %v656 = vunpack.c.h.b16 %v454
        %v657 = vpack.c.b16 %v597, %v593
        %v658 = vpack.c.b16 %v598, %v594
        %v659 = vpack.c.b16 %v599, %v595
        %v660 = vpack.c.b16 %v600, %v596
        %v661 = vpack.c.b16 %v605, %v601
        %v662 = vpack.c.b16 %v606, %v602
        %v663 = vpack.c.b16 %v607, %v603
        %v664 = vpack.c.b16 %v608, %v604
        %v665 = vpack.c.b16 %v613, %v609
        %v666 = vpack.c.b16 %v614, %v610
        %v667 = vpack.c.b16 %v615, %v611
        %v668 = vpack.c.b16 %v616, %v612
        %v669 = vpack.c.b16 %v621, %v617
        %v670 = vpack.c.b16 %v622, %v618
        %v671 = vpack.c.b16 %v623, %v619
        %v672 = vpack.c.b16 %v624, %v620
        %v673 = vpack.c.b16 %v629, %v625
        %v674 = vpack.c.b16 %v630, %v626
        %v675 = vpack.c.b16 %v631, %v627
        %v676 = vpack.c.b16 %v632, %v628
        %v677 = vpack.c.b16 %v637, %v633
        %v678 = vpack.c.b16 %v638, %v634
        %v679 = vpack.c.b16 %v639, %v635
        %v680 = vpack.c.b16 %v640, %v636
        %v681 = vpack.c.b16 %v645, %v641
        %v682 = vpack.c.b16 %v646, %v642
        %v683 = vpack.c.b16 %v647, %v643
        %v684 = vpack.c.b16 %v648, %v644
        %v685 = vpack.c.b16 %v653, %v649
        %v686 = vpack.c.b16 %v654, %v650
        %v687 = vpack.c.b16 %v655, %v651
        %v688 = vpack.c.b16 %v656, %v652
        %721 = vmatpush.bf16.msra.mxu0 %v685
        %722 = vmatpush.bf16.msra.mxu0 %v681
        %723 = vmatpush.bf16.msra.mxu0 %v677
        %724 = vmatpush.bf16.msra.mxu0 %v673
        %725 = vmatpush.bf16.msra.mxu0 %v669
        %726 = vmatpush.bf16.msra.mxu0 %v665
        %727 = vmatpush.bf16.msra.mxu0 %v661
        %728 = vmatpush.bf16.msra.mxu0 %v657
        %729 = vmatmul.bf16.gmra.mxu0 %v529
        %v730 = vpop.f32.mrf.mxu0
        %v731 = vadd.f32 %v457, %v730
        %v732 = vpop.f32.mrf.mxu0
        %v733 = vadd.f32 %v457, %v732
        %734 = vmatmul.bf16.gmra.mxu0 %v530
        %v735 = vpop.f32.mrf.mxu0
        %v736 = vadd.f32 %v457, %v735
        %v737 = vpop.f32.mrf.mxu0
        %v738 = vadd.f32 %v457, %v737
        %739 = vmatmul.bf16.gmra.mxu0 %v531
        %v740 = vpop.f32.mrf.mxu0
        %v741 = vadd.f32 %v457, %v740
        %v742 = vpop.f32.mrf.mxu0
        %v743 = vadd.f32 %v457, %v742
        %744 = vmatmul.bf16.gmra.mxu0 %v532
        %v745 = vpop.f32.mrf.mxu0
        %v746 = vadd.f32 %v457, %v745
        %v747 = vpop.f32.mrf.mxu0
        %v748 = vadd.f32 %v457, %v747
        %749 = vmatmul.bf16.gmra.mxu0 %v533
        %v750 = vpop.f32.mrf.mxu0
        %v751 = vadd.f32 %v457, %v750
        %v752 = vpop.f32.mrf.mxu0
        %v753 = vadd.f32 %v457, %v752
        %754 = vmatmul.bf16.gmra.mxu0 %v534
        %v755 = vpop.f32.mrf.mxu0
        %v756 = vadd.f32 %v457, %v755
        %v757 = vpop.f32.mrf.mxu0
        %v758 = vadd.f32 %v457, %v757
        %759 = vmatmul.bf16.gmra.mxu0 %v535
        %v760 = vpop.f32.mrf.mxu0
        %v761 = vadd.f32 %v457, %v760
        %v762 = vpop.f32.mrf.mxu0
        %v763 = vadd.f32 %v457, %v762
        %764 = vmatmul.bf16.gmra.mxu0 %v536
        %v765 = vpop.f32.mrf.mxu0
        %v766 = vadd.f32 %v457, %v765
        %v767 = vpop.f32.mrf.mxu0
        %v768 = vadd.f32 %v457, %v767
        %769 = vmatmul.bf16.gmra.mxu0 %v537
        %v770 = vpop.f32.mrf.mxu0
        %v771 = vadd.f32 %v457, %v770
        %v772 = vpop.f32.mrf.mxu0
        %v773 = vadd.f32 %v457, %v772
        %774 = vmatmul.bf16.gmra.mxu0 %v538
        %v775 = vpop.f32.mrf.mxu0
        %v776 = vadd.f32 %v457, %v775
        %v777 = vpop.f32.mrf.mxu0
        %v778 = vadd.f32 %v457, %v777
        %779 = vmatmul.bf16.gmra.mxu0 %v539
        %v780 = vpop.f32.mrf.mxu0
        %v781 = vadd.f32 %v457, %v780
        %v782 = vpop.f32.mrf.mxu0
        %v783 = vadd.f32 %v457, %v782
        %784 = vmatmul.bf16.gmra.mxu0 %v540
        %v785 = vpop.f32.mrf.mxu0
        %v786 = vadd.f32 %v457, %v785
        %v787 = vpop.f32.mrf.mxu0
        %v788 = vadd.f32 %v457, %v787
        %789 = vmatmul.bf16.gmra.mxu0 %v541
        %v790 = vpop.f32.mrf.mxu0
        %v791 = vadd.f32 %v457, %v790
        %v792 = vpop.f32.mrf.mxu0
        %v793 = vadd.f32 %v457, %v792
        %794 = vmatmul.bf16.gmra.mxu0 %v542
        %v795 = vpop.f32.mrf.mxu0
        %v796 = vadd.f32 %v457, %v795
        %v797 = vpop.f32.mrf.mxu0
        %v798 = vadd.f32 %v457, %v797
        %799 = vmatmul.bf16.gmra.mxu0 %v543
        %v800 = vpop.f32.mrf.mxu0
        %v801 = vadd.f32 %v457, %v800
        %v802 = vpop.f32.mrf.mxu0
        %v803 = vadd.f32 %v457, %v802
        %804 = vmatmul.bf16.gmra.mxu0 %v544
        %v805 = vpop.f32.mrf.mxu0
        %v806 = vadd.f32 %v457, %v805
        %v807 = vpop.f32.mrf.mxu0
        %v808 = vadd.f32 %v457, %v807
        %809 = vdwg.mxu0
        %810 = vmatpush.bf16.msra.mxu0 %v686
        %811 = vmatpush.bf16.msra.mxu0 %v682
        %812 = vmatpush.bf16.msra.mxu0 %v678
        %813 = vmatpush.bf16.msra.mxu0 %v674
        %814 = vmatpush.bf16.msra.mxu0 %v670
        %815 = vmatpush.bf16.msra.mxu0 %v666
        %816 = vmatpush.bf16.msra.mxu0 %v662
        %817 = vmatpush.bf16.msra.mxu0 %v658
        %818 = vmatmul.bf16.gmra.mxu0 %v529
        %v819 = vpop.f32.mrf.mxu0
        %v820 = vadd.f32 %v458, %v819
        %v821 = vpop.f32.mrf.mxu0
        %v822 = vadd.f32 %v458, %v821
        %823 = vmatmul.bf16.gmra.mxu0 %v530
        %v824 = vpop.f32.mrf.mxu0
        %v825 = vadd.f32 %v458, %v824
        %v826 = vpop.f32.mrf.mxu0
        %v827 = vadd.f32 %v458, %v826
        %828 = vmatmul.bf16.gmra.mxu0 %v531
        %v829 = vpop.f32.mrf.mxu0
        %v830 = vadd.f32 %v458, %v829
        %v831 = vpop.f32.mrf.mxu0
        %v832 = vadd.f32 %v458, %v831
        %833 = vmatmul.bf16.gmra.mxu0 %v532
        %v834 = vpop.f32.mrf.mxu0
        %v835 = vadd.f32 %v458, %v834
        %v836 = vpop.f32.mrf.mxu0
        %v837 = vadd.f32 %v458, %v836
        %838 = vmatmul.bf16.gmra.mxu0 %v533
        %v839 = vpop.f32.mrf.mxu0
        %v840 = vadd.f32 %v458, %v839
        %v841 = vpop.f32.mrf.mxu0
        %v842 = vadd.f32 %v458, %v841
        %843 = vmatmul.bf16.gmra.mxu0 %v534
        %v844 = vpop.f32.mrf.mxu0
        %v845 = vadd.f32 %v458, %v844
        %v846 = vpop.f32.mrf.mxu0
        %v847 = vadd.f32 %v458, %v846
        %848 = vmatmul.bf16.gmra.mxu0 %v535
        %v849 = vpop.f32.mrf.mxu0
        %v850 = vadd.f32 %v458, %v849
        %v851 = vpop.f32.mrf.mxu0
        %v852 = vadd.f32 %v458, %v851
        %853 = vmatmul.bf16.gmra.mxu0 %v536
        %v854 = vpop.f32.mrf.mxu0
        %v855 = vadd.f32 %v458, %v854
        %v856 = vpop.f32.mrf.mxu0
        %v857 = vadd.f32 %v458, %v856
        %858 = vmatmul.bf16.gmra.mxu0 %v537
        %v859 = vpop.f32.mrf.mxu0
        %v860 = vadd.f32 %v458, %v859
        %v861 = vpop.f32.mrf.mxu0
        %v862 = vadd.f32 %v458, %v861
        %863 = vmatmul.bf16.gmra.mxu0 %v538
        %v864 = vpop.f32.mrf.mxu0
        %v865 = vadd.f32 %v458, %v864
        %v866 = vpop.f32.mrf.mxu0
        %v867 = vadd.f32 %v458, %v866
        %868 = vmatmul.bf16.gmra.mxu0 %v539
        %v869 = vpop.f32.mrf.mxu0
        %v870 = vadd.f32 %v458, %v869
        %v871 = vpop.f32.mrf.mxu0
        %v872 = vadd.f32 %v458, %v871
        %873 = vmatmul.bf16.gmra.mxu0 %v540
        %v874 = vpop.f32.mrf.mxu0
        %v875 = vadd.f32 %v458, %v874
        %v876 = vpop.f32.mrf.mxu0
        %v877 = vadd.f32 %v458, %v876
        %878 = vmatmul.bf16.gmra.mxu0 %v541
        %v879 = vpop.f32.mrf.mxu0
        %v880 = vadd.f32 %v458, %v879
        %v881 = vpop.f32.mrf.mxu0
        %v882 = vadd.f32 %v458, %v881
        %883 = vmatmul.bf16.gmra.mxu0 %v542
        %v884 = vpop.f32.mrf.mxu0
        %v885 = vadd.f32 %v458, %v884
        %v886 = vpop.f32.mrf.mxu0
        %v887 = vadd.f32 %v458, %v886
        %888 = vmatmul.bf16.gmra.mxu0 %v543
        %v889 = vpop.f32.mrf.mxu0
        %v890 = vadd.f32 %v458, %v889
        %v891 = vpop.f32.mrf.mxu0
        %v892 = vadd.f32 %v458, %v891
        %893 = vmatmul.bf16.gmra.mxu0 %v544
        %v894 = vpop.f32.mrf.mxu0
        %v895 = vadd.f32 %v458, %v894
        %v896 = vpop.f32.mrf.mxu0
        %v897 = vadd.f32 %v458, %v896
        %898 = vdwg.mxu0
        %899 = vmatpush.bf16.msra.mxu0 %v687
        %900 = vmatpush.bf16.msra.mxu0 %v683
        %901 = vmatpush.bf16.msra.mxu0 %v679
        %902 = vmatpush.bf16.msra.mxu0 %v675
        %903 = vmatpush.bf16.msra.mxu0 %v671
        %904 = vmatpush.bf16.msra.mxu0 %v667
        %905 = vmatpush.bf16.msra.mxu0 %v663
        %906 = vmatpush.bf16.msra.mxu0 %v659
        %907 = vmatmul.bf16.gmra.mxu0 %v529
        %v908 = vpop.f32.mrf.mxu0
        %v909 = vadd.f32 %v459, %v908
        %v910 = vpop.f32.mrf.mxu0
        %v911 = vadd.f32 %v459, %v910
        %912 = vmatmul.bf16.gmra.mxu0 %v530
        %v913 = vpop.f32.mrf.mxu0
        %v914 = vadd.f32 %v459, %v913
        %v915 = vpop.f32.mrf.mxu0
        %v916 = vadd.f32 %v459, %v915
        %917 = vmatmul.bf16.gmra.mxu0 %v531
        %v918 = vpop.f32.mrf.mxu0
        %v919 = vadd.f32 %v459, %v918
        %v920 = vpop.f32.mrf.mxu0
        %v921 = vadd.f32 %v459, %v920
        %922 = vmatmul.bf16.gmra.mxu0 %v532
        %v923 = vpop.f32.mrf.mxu0
        %v924 = vadd.f32 %v459, %v923
        %v925 = vpop.f32.mrf.mxu0
        %v926 = vadd.f32 %v459, %v925
        %927 = vmatmul.bf16.gmra.mxu0 %v533
        %v928 = vpop.f32.mrf.mxu0
        %v929 = vadd.f32 %v459, %v928
        %v930 = vpop.f32.mrf.mxu0
        %v931 = vadd.f32 %v459, %v930
        %932 = vmatmul.bf16.gmra.mxu0 %v534
        %v933 = vpop.f32.mrf.mxu0
        %v934 = vadd.f32 %v459, %v933
        %v935 = vpop.f32.mrf.mxu0
        %v936 = vadd.f32 %v459, %v935
        %937 = vmatmul.bf16.gmra.mxu0 %v535
        %v938 = vpop.f32.mrf.mxu0
        %v939 = vadd.f32 %v459, %v938
        %v940 = vpop.f32.mrf.mxu0
        %v941 = vadd.f32 %v459, %v940
        %942 = vmatmul.bf16.gmra.mxu0 %v536
        %v943 = vpop.f32.mrf.mxu0
        %v944 = vadd.f32 %v459, %v943
        %v945 = vpop.f32.mrf.mxu0
        %v946 = vadd.f32 %v459, %v945
        %947 = vmatmul.bf16.gmra.mxu0 %v537
        %v948 = vpop.f32.mrf.mxu0
        %v949 = vadd.f32 %v459, %v948
        %v950 = vpop.f32.mrf.mxu0
        %v951 = vadd.f32 %v459, %v950
        %952 = vmatmul.bf16.gmra.mxu0 %v538
        %v953 = vpop.f32.mrf.mxu0
        %v954 = vadd.f32 %v459, %v953
        %v955 = vpop.f32.mrf.mxu0
        %v956 = vadd.f32 %v459, %v955
        %957 = vmatmul.bf16.gmra.mxu0 %v539
        %v958 = vpop.f32.mrf.mxu0
        %v959 = vadd.f32 %v459, %v958
        %v960 = vpop.f32.mrf.mxu0
        %v961 = vadd.f32 %v459, %v960
        %962 = vmatmul.bf16.gmra.mxu0 %v540
        %v963 = vpop.f32.mrf.mxu0
        %v964 = vadd.f32 %v459, %v963
        %v965 = vpop.f32.mrf.mxu0
        %v966 = vadd.f32 %v459, %v965
        %967 = vmatmul.bf16.gmra.mxu0 %v541
        %v968 = vpop.f32.mrf.mxu0
        %v969 = vadd.f32 %v459, %v968
        %v970 = vpop.f32.mrf.mxu0
        %v971 = vadd.f32 %v459, %v970
        %972 = vmatmul.bf16.gmra.mxu0 %v542
        %v973 = vpop.f32.mrf.mxu0
        %v974 = vadd.f32 %v459, %v973
        %v975 = vpop.f32.mrf.mxu0
        %v976 = vadd.f32 %v459, %v975
        %977 = vmatmul.bf16.gmra.mxu0 %v543
        %v978 = vpop.f32.mrf.mxu0
        %v979 = vadd.f32 %v459, %v978
        %v980 = vpop.f32.mrf.mxu0
        %v981 = vadd.f32 %v459, %v980
        %982 = vmatmul.bf16.gmra.mxu0 %v544
        %v983 = vpop.f32.mrf.mxu0
        %v984 = vadd.f32 %v459, %v983
        %v985 = vpop.f32.mrf.mxu0
        %v986 = vadd.f32 %v459, %v985
        %987 = vdwg.mxu0
        %988 = vmatpush.bf16.msra.mxu0 %v688
        %989 = vmatpush.bf16.msra.mxu0 %v684
        %990 = vmatpush.bf16.msra.mxu0 %v680
        %991 = vmatpush.bf16.msra.mxu0 %v676
        %992 = vmatpush.bf16.msra.mxu0 %v672
        %993 = vmatpush.bf16.msra.mxu0 %v668
        %994 = vmatpush.bf16.msra.mxu0 %v664
        %995 = vmatpush.bf16.msra.mxu0 %v660
        %996 = vmatmul.bf16.gmra.mxu0 %v529
        %v997 = vpop.f32.mrf.mxu0
        %v998 = vadd.f32 %v460, %v997
        %v999 = vpop.f32.mrf.mxu0
        %v1000 = vadd.f32 %v460, %v999
        %1001 = vmatmul.bf16.gmra.mxu0 %v530
        %v1002 = vpop.f32.mrf.mxu0
        %v1003 = vadd.f32 %v460, %v1002
        %v1004 = vpop.f32.mrf.mxu0
        %v1005 = vadd.f32 %v460, %v1004
        %1006 = vmatmul.bf16.gmra.mxu0 %v531
        %v1007 = vpop.f32.mrf.mxu0
        %v1008 = vadd.f32 %v460, %v1007
        %v1009 = vpop.f32.mrf.mxu0
        %v1010 = vadd.f32 %v460, %v1009
        %1011 = vmatmul.bf16.gmra.mxu0 %v532
        %v1012 = vpop.f32.mrf.mxu0
        %v1013 = vadd.f32 %v460, %v1012
        %v1014 = vpop.f32.mrf.mxu0
        %v1015 = vadd.f32 %v460, %v1014
        %1016 = vmatmul.bf16.gmra.mxu0 %v533
        %v1017 = vpop.f32.mrf.mxu0
        %v1018 = vadd.f32 %v460, %v1017
        %v1019 = vpop.f32.mrf.mxu0
        %v1020 = vadd.f32 %v460, %v1019
        %1021 = vmatmul.bf16.gmra.mxu0 %v534
        %v1022 = vpop.f32.mrf.mxu0
        %v1023 = vadd.f32 %v460, %v1022
        %v1024 = vpop.f32.mrf.mxu0
        %v1025 = vadd.f32 %v460, %v1024
        %1026 = vmatmul.bf16.gmra.mxu0 %v535
        %v1027 = vpop.f32.mrf.mxu0
        %v1028 = vadd.f32 %v460, %v1027
        %v1029 = vpop.f32.mrf.mxu0
        %v1030 = vadd.f32 %v460, %v1029
        %1031 = vmatmul.bf16.gmra.mxu0 %v536
        %v1032 = vpop.f32.mrf.mxu0
        %v1033 = vadd.f32 %v460, %v1032
        %v1034 = vpop.f32.mrf.mxu0
        %v1035 = vadd.f32 %v460, %v1034
        %1036 = vmatmul.bf16.gmra.mxu0 %v537
        %v1037 = vpop.f32.mrf.mxu0
        %v1038 = vadd.f32 %v460, %v1037
        %v1039 = vpop.f32.mrf.mxu0
        %v1040 = vadd.f32 %v460, %v1039
        %1041 = vmatmul.bf16.gmra.mxu0 %v538
        %v1042 = vpop.f32.mrf.mxu0
        %v1043 = vadd.f32 %v460, %v1042
        %v1044 = vpop.f32.mrf.mxu0
        %v1045 = vadd.f32 %v460, %v1044
        %1046 = vmatmul.bf16.gmra.mxu0 %v539
        %v1047 = vpop.f32.mrf.mxu0
        %v1048 = vadd.f32 %v460, %v1047
        %v1049 = vpop.f32.mrf.mxu0
        %v1050 = vadd.f32 %v460, %v1049
        %1051 = vmatmul.bf16.gmra.mxu0 %v540
        %v1052 = vpop.f32.mrf.mxu0
        %v1053 = vadd.f32 %v460, %v1052
        %v1054 = vpop.f32.mrf.mxu0
        %v1055 = vadd.f32 %v460, %v1054
        %1056 = vmatmul.bf16.gmra.mxu0 %v541
        %v1057 = vpop.f32.mrf.mxu0
        %v1058 = vadd.f32 %v460, %v1057
        %v1059 = vpop.f32.mrf.mxu0
        %v1060 = vadd.f32 %v460, %v1059
        %1061 = vmatmul.bf16.gmra.mxu0 %v542
        %v1062 = vpop.f32.mrf.mxu0
        %v1063 = vadd.f32 %v460, %v1062
        %v1064 = vpop.f32.mrf.mxu0
        %v1065 = vadd.f32 %v460, %v1064
        %1066 = vmatmul.bf16.gmra.mxu0 %v543
        %v1067 = vpop.f32.mrf.mxu0
        %v1068 = vadd.f32 %v460, %v1067
        %v1069 = vpop.f32.mrf.mxu0
        %v1070 = vadd.f32 %v460, %v1069
        %1071 = vmatmul.bf16.gmra.mxu0 %v544
        %v1072 = vpop.f32.mrf.mxu0
        %v1073 = vadd.f32 %v460, %v1072
        %v1074 = vpop.f32.mrf.mxu0
        %v1075 = vadd.f32 %v460, %v1074
        %1076 = vdwg.mxu0
        %v1077 = vmax.f32 %v731, 0.0
        %v1078 = vmax.f32 %v820, 0.0
        %v1079 = vmax.f32 %v909, 0.0
        %v1080 = vmax.f32 %v998, 0.0
        %v1081 = vmax.f32 %v733, 0.0
        %v1082 = vmax.f32 %v822, 0.0
        %v1083 = vmax.f32 %v911, 0.0
        %v1084 = vmax.f32 %v1000, 0.0
        %v1085 = vmax.f32 %v736, 0.0
        %v1086 = vmax.f32 %v825, 0.0
        %v1087 = vmax.f32 %v914, 0.0
        %v1088 = vmax.f32 %v1003, 0.0
        %v1089 = vmax.f32 %v738, 0.0
        %v1090 = vmax.f32 %v827, 0.0
        %v1091 = vmax.f32 %v916, 0.0
        %v1092 = vmax.f32 %v1005, 0.0
        %v1093 = vmax.f32 %v741, 0.0
        %v1094 = vmax.f32 %v830, 0.0
        %v1095 = vmax.f32 %v919, 0.0
        %v1096 = vmax.f32 %v1008, 0.0
        %v1097 = vmax.f32 %v743, 0.0
        %v1098 = vmax.f32 %v832, 0.0
        %v1099 = vmax.f32 %v921, 0.0
        %v1100 = vmax.f32 %v1010, 0.0
        %v1101 = vmax.f32 %v746, 0.0
        %v1102 = vmax.f32 %v835, 0.0
        %v1103 = vmax.f32 %v924, 0.0
        %v1104 = vmax.f32 %v1013, 0.0
        %v1105 = vmax.f32 %v748, 0.0
        %v1106 = vmax.f32 %v837, 0.0
        %v1107 = vmax.f32 %v926, 0.0
        %v1108 = vmax.f32 %v1015, 0.0
        %v1109 = vmax.f32 %v751, 0.0
        %v1110 = vmax.f32 %v840, 0.0
        %v1111 = vmax.f32 %v929, 0.0
        %v1112 = vmax.f32 %v1018, 0.0
        %v1113 = vmax.f32 %v753, 0.0
        %v1114 = vmax.f32 %v842, 0.0
        %v1115 = vmax.f32 %v931, 0.0
        %v1116 = vmax.f32 %v1020, 0.0
        %v1117 = vmax.f32 %v756, 0.0
        %v1118 = vmax.f32 %v845, 0.0
        %v1119 = vmax.f32 %v934, 0.0
        %v1120 = vmax.f32 %v1023, 0.0
        %v1121 = vmax.f32 %v758, 0.0
        %v1122 = vmax.f32 %v847, 0.0
        %v1123 = vmax.f32 %v936, 0.0
        %v1124 = vmax.f32 %v1025, 0.0
        %v1125 = vmax.f32 %v761, 0.0
        %v1126 = vmax.f32 %v850, 0.0
        %v1127 = vmax.f32 %v939, 0.0
        %v1128 = vmax.f32 %v1028, 0.0
        %v1129 = vmax.f32 %v763, 0.0
        %v1130 = vmax.f32 %v852, 0.0
        %v1131 = vmax.f32 %v941, 0.0
        %v1132 = vmax.f32 %v1030, 0.0
        %v1133 = vmax.f32 %v766, 0.0
        %v1134 = vmax.f32 %v855, 0.0
        %v1135 = vmax.f32 %v944, 0.0
        %v1136 = vmax.f32 %v1033, 0.0
        %v1137 = vmax.f32 %v768, 0.0
        %v1138 = vmax.f32 %v857, 0.0
        %v1139 = vmax.f32 %v946, 0.0
        %v1140 = vmax.f32 %v1035, 0.0
        %v1141 = vmax.f32 %v771, 0.0
        %v1142 = vmax.f32 %v860, 0.0
        %v1143 = vmax.f32 %v949, 0.0
        %v1144 = vmax.f32 %v1038, 0.0
        %v1145 = vmax.f32 %v773, 0.0
        %v1146 = vmax.f32 %v862, 0.0
        %v1147 = vmax.f32 %v951, 0.0
        %v1148 = vmax.f32 %v1040, 0.0
        %v1149 = vmax.f32 %v776, 0.0
        %v1150 = vmax.f32 %v865, 0.0
        %v1151 = vmax.f32 %v954, 0.0
        %v1152 = vmax.f32 %v1043, 0.0
        %v1153 = vmax.f32 %v778, 0.0
        %v1154 = vmax.f32 %v867, 0.0
        %v1155 = vmax.f32 %v956, 0.0
        %v1156 = vmax.f32 %v1045, 0.0
        %v1157 = vmax.f32 %v781, 0.0
        %v1158 = vmax.f32 %v870, 0.0
        %v1159 = vmax.f32 %v959, 0.0
        %v1160 = vmax.f32 %v1048, 0.0
        %v1161 = vmax.f32 %v783, 0.0
        %v1162 = vmax.f32 %v872, 0.0
        %v1163 = vmax.f32 %v961, 0.0
        %v1164 = vmax.f32 %v1050, 0.0
        %v1165 = vmax.f32 %v786, 0.0
        %v1166 = vmax.f32 %v875, 0.0
        %v1167 = vmax.f32 %v964, 0.0
        %v1168 = vmax.f32 %v1053, 0.0
        %v1169 = vmax.f32 %v788, 0.0
        %v1170 = vmax.f32 %v877, 0.0
        %v1171 = vmax.f32 %v966, 0.0
        %v1172 = vmax.f32 %v1055, 0.0
        %v1173 = vmax.f32 %v791, 0.0
        %v1174 = vmax.f32 %v880, 0.0
        %v1175 = vmax.f32 %v969, 0.0
        %v1176 = vmax.f32 %v1058, 0.0
        %v1177 = vmax.f32 %v793, 0.0
        %v1178 = vmax.f32 %v882, 0.0
        %v1179 = vmax.f32 %v971, 0.0
        %v1180 = vmax.f32 %v1060, 0.0
        %v1181 = vmax.f32 %v796, 0.0
        %v1182 = vmax.f32 %v885, 0.0
        %v1183 = vmax.f32 %v974, 0.0
        %v1184 = vmax.f32 %v1063, 0.0
        %v1185 = vmax.f32 %v798, 0.0
        %v1186 = vmax.f32 %v887, 0.0
        %v1187 = vmax.f32 %v976, 0.0
        %v1188 = vmax.f32 %v1065, 0.0
        %v1189 = vmax.f32 %v801, 0.0
        %v1190 = vmax.f32 %v890, 0.0
        %v1191 = vmax.f32 %v979, 0.0
        %v1192 = vmax.f32 %v1068, 0.0
        %v1193 = vmax.f32 %v803, 0.0
        %v1194 = vmax.f32 %v892, 0.0
        %v1195 = vmax.f32 %v981, 0.0
        %v1196 = vmax.f32 %v1070, 0.0
        %v1197 = vmax.f32 %v806, 0.0
        %v1198 = vmax.f32 %v895, 0.0
        %v1199 = vmax.f32 %v984, 0.0
        %v1200 = vmax.f32 %v1073, 0.0
        %v1201 = vmax.f32 %v808, 0.0
        %v1202 = vmax.f32 %v897, 0.0
        %v1203 = vmax.f32 %v986, 0.0
        %v1204 = vmax.f32 %v1075, 0.0
        %v1205 = vld [vmem:[#allocation2] sm:$0xff]
        %v1206 = vld [vmem:[#allocation2 + $0x8] sm:$0xff]
        %v1207 = vld [vmem:[#allocation2 + $0x10] sm:$0xff]
        %v1208 = vld [vmem:[#allocation2 + $0x18] sm:$0xff]
        %v1209 = vld [vmem:[#allocation2 + $0x20] sm:$0xff]
        %v1210 = vld [vmem:[#allocation2 + $0x28] sm:$0xff]
        %v1211 = vld [vmem:[#allocation2 + $0x30] sm:$0xff]
        %v1212 = vld [vmem:[#allocation2 + $0x38] sm:$0xff]
        %v1213 = vld [vmem:[#allocation2 + $0x40] sm:$0xff]
        %v1214 = vld [vmem:[#allocation2 + $0x48] sm:$0xff]
        %v1215 = vld [vmem:[#allocation2 + $0x50] sm:$0xff]
        %v1216 = vld [vmem:[#allocation2 + $0x58] sm:$0xff]
        %v1217 = vld [vmem:[#allocation2 + $0x60] sm:$0xff]
        %v1218 = vld [vmem:[#allocation2 + $0x68] sm:$0xff]
        %v1219 = vld [vmem:[#allocation2 + $0x70] sm:$0xff]
        %v1220 = vld [vmem:[#allocation2 + $0x78] sm:$0xff]
        %v1221 = vld [vmem:[#allocation2 + $0x80] sm:$0xff]
        %v1222 = vld [vmem:[#allocation2 + $0x88] sm:$0xff]
        %v1223 = vld [vmem:[#allocation2 + $0x90] sm:$0xff]
        %v1224 = vld [vmem:[#allocation2 + $0x98] sm:$0xff]
        %v1225 = vld [vmem:[#allocation2 + $0xa0] sm:$0xff]
        %v1226 = vld [vmem:[#allocation2 + $0xa8] sm:$0xff]
        %v1227 = vld [vmem:[#allocation2 + $0xb0] sm:$0xff]
        %v1228 = vld [vmem:[#allocation2 + $0xb8] sm:$0xff]
        %v1229 = vld [vmem:[#allocation2 + $0xc0] sm:$0xff]
        %v1230 = vld [vmem:[#allocation2 + $0xc8] sm:$0xff]
        %v1231 = vld [vmem:[#allocation2 + $0xd0] sm:$0xff]
        %v1232 = vld [vmem:[#allocation2 + $0xd8] sm:$0xff]
        %v1233 = vld [vmem:[#allocation2 + $0xe0] sm:$0xff]
        %v1234 = vld [vmem:[#allocation2 + $0xe8] sm:$0xff]
        %v1235 = vld [vmem:[#allocation2 + $0xf0] sm:$0xff]
        %v1236 = vld [vmem:[#allocation2 + $0xf8] sm:$0xff]
        %v1237 = vpack.c.bf16 %v1081, %v1077
        %v1238 = vpack.c.bf16 %v1082, %v1078
        %v1239 = vpack.c.bf16 %v1083, %v1079
        %v1240 = vpack.c.bf16 %v1084, %v1080
        %v1241 = vpack.c.bf16 %v1089, %v1085
        %v1242 = vpack.c.bf16 %v1090, %v1086
        %v1243 = vpack.c.bf16 %v1091, %v1087
        %v1244 = vpack.c.bf16 %v1092, %v1088
        %v1245 = vpack.c.bf16 %v1097, %v1093
        %v1246 = vpack.c.bf16 %v1098, %v1094
        %v1247 = vpack.c.bf16 %v1099, %v1095
        %v1248 = vpack.c.bf16 %v1100, %v1096
        %v1249 = vpack.c.bf16 %v1105, %v1101
        %v1250 = vpack.c.bf16 %v1106, %v1102
        %v1251 = vpack.c.bf16 %v1107, %v1103
        %v1252 = vpack.c.bf16 %v1108, %v1104
        %v1253 = vpack.c.bf16 %v1113, %v1109
        %v1254 = vpack.c.bf16 %v1114, %v1110
        %v1255 = vpack.c.bf16 %v1115, %v1111
        %v1256 = vpack.c.bf16 %v1116, %v1112
        %v1257 = vpack.c.bf16 %v1121, %v1117
        %v1258 = vpack.c.bf16 %v1122, %v1118
        %v1259 = vpack.c.bf16 %v1123, %v1119
        %v1260 = vpack.c.bf16 %v1124, %v1120
        %v1261 = vpack.c.bf16 %v1129, %v1125
        %v1262 = vpack.c.bf16 %v1130, %v1126
        %v1263 = vpack.c.bf16 %v1131, %v1127
        %v1264 = vpack.c.bf16 %v1132, %v1128
        %v1265 = vpack.c.bf16 %v1137, %v1133
        %v1266 = vpack.c.bf16 %v1138, %v1134
        %v1267 = vpack.c.bf16 %v1139, %v1135
        %v1268 = vpack.c.bf16 %v1140, %v1136
        %v1269 = vpack.c.bf16 %v1145, %v1141
        %v1270 = vpack.c.bf16 %v1146, %v1142
        %v1271 = vpack.c.bf16 %v1147, %v1143
        %v1272 = vpack.c.bf16 %v1148, %v1144
        %v1273 = vpack.c.bf16 %v1153, %v1149
        %v1274 = vpack.c.bf16 %v1154, %v1150
        %v1275 = vpack.c.bf16 %v1155, %v1151
        %v1276 = vpack.c.bf16 %v1156, %v1152
        %v1277 = vpack.c.bf16 %v1161, %v1157
        %v1278 = vpack.c.bf16 %v1162, %v1158
        %v1279 = vpack.c.bf16 %v1163, %v1159
        %v1280 = vpack.c.bf16 %v1164, %v1160
        %v1281 = vpack.c.bf16 %v1169, %v1165
        %v1282 = vpack.c.bf16 %v1170, %v1166
        %v1283 = vpack.c.bf16 %v1171, %v1167
        %v1284 = vpack.c.bf16 %v1172, %v1168
        %v1285 = vpack.c.bf16 %v1177, %v1173
        %v1286 = vpack.c.bf16 %v1178, %v1174
        %v1287 = vpack.c.bf16 %v1179, %v1175
        %v1288 = vpack.c.bf16 %v1180, %v1176
        %v1289 = vpack.c.bf16 %v1185, %v1181
        %v1290 = vpack.c.bf16 %v1186, %v1182
        %v1291 = vpack.c.bf16 %v1187, %v1183
        %v1292 = vpack.c.bf16 %v1188, %v1184
        %v1293 = vpack.c.bf16 %v1193, %v1189
        %v1294 = vpack.c.bf16 %v1194, %v1190
        %v1295 = vpack.c.bf16 %v1195, %v1191
        %v1296 = vpack.c.bf16 %v1196, %v1192
        %v1297 = vpack.c.bf16 %v1201, %v1197
        %v1298 = vpack.c.bf16 %v1202, %v1198
        %v1299 = vpack.c.bf16 %v1203, %v1199
        %v1300 = vpack.c.bf16 %v1204, %v1200
        %v1301 = vld [vmem:[%s352] sm:$0xf]
        %v1302 = vld [vmem:[%s352 + $0x4] sm:$0xf]
        %v1303 = vld [vmem:[%s352 + $0x8] sm:$0xf]
        %v1304 = vld [vmem:[%s352 + $0xc] sm:$0xf]
        %v1305 = vld [vmem:[%s352 + $0x10] sm:$0xf]
        %v1306 = vld [vmem:[%s352 + $0x14] sm:$0xf]
        %v1307 = vld [vmem:[%s352 + $0x18] sm:$0xf]
        %v1308 = vld [vmem:[%s352 + $0x1c] sm:$0xf]
        %v1309 = vld [vmem:[%s352 + $0x20] sm:$0xf]
        %v1310 = vld [vmem:[%s352 + $0x24] sm:$0xf]
        %v1311 = vld [vmem:[%s352 + $0x28] sm:$0xf]
        %v1312 = vld [vmem:[%s352 + $0x2c] sm:$0xf]
        %v1313 = vld [vmem:[%s352 + $0x30] sm:$0xf]
        %v1314 = vld [vmem:[%s352 + $0x34] sm:$0xf]
        %v1315 = vld [vmem:[%s352 + $0x38] sm:$0xf]
        %v1316 = vld [vmem:[%s352 + $0x3c] sm:$0xf]
        %v1317 = vld [vmem:[%s352 + $0x40] sm:$0xf]
        %v1318 = vld [vmem:[%s352 + $0x44] sm:$0xf]
        %v1319 = vld [vmem:[%s352 + $0x48] sm:$0xf]
        %v1320 = vld [vmem:[%s352 + $0x4c] sm:$0xf]
        %v1321 = vld [vmem:[%s352 + $0x50] sm:$0xf]
        %v1322 = vld [vmem:[%s352 + $0x54] sm:$0xf]
        %v1323 = vld [vmem:[%s352 + $0x58] sm:$0xf]
        %v1324 = vld [vmem:[%s352 + $0x5c] sm:$0xf]
        %v1325 = vld [vmem:[%s352 + $0x60] sm:$0xf]
        %v1326 = vld [vmem:[%s352 + $0x64] sm:$0xf]
        %v1327 = vld [vmem:[%s352 + $0x68] sm:$0xf]
        %v1328 = vld [vmem:[%s352 + $0x6c] sm:$0xf]
        %v1329 = vld [vmem:[%s352 + $0x70] sm:$0xf]
        %v1330 = vld [vmem:[%s352 + $0x74] sm:$0xf]
        %v1331 = vld [vmem:[%s352 + $0x78] sm:$0xf]
        %v1332 = vld [vmem:[%s352 + $0x7c] sm:$0xf]
        %v1333 = vld [vmem:[%s352 + $0x80] sm:$0xf]
        %v1334 = vld [vmem:[%s352 + $0x84] sm:$0xf]
        %v1335 = vld [vmem:[%s352 + $0x88] sm:$0xf]
        %v1336 = vld [vmem:[%s352 + $0x8c] sm:$0xf]
        %v1337 = vld [vmem:[%s352 + $0x90] sm:$0xf]
        %v1338 = vld [vmem:[%s352 + $0x94] sm:$0xf]
        %v1339 = vld [vmem:[%s352 + $0x98] sm:$0xf]
        %v1340 = vld [vmem:[%s352 + $0x9c] sm:$0xf]
        %v1341 = vld [vmem:[%s352 + $0xa0] sm:$0xf]
        %v1342 = vld [vmem:[%s352 + $0xa4] sm:$0xf]
        %v1343 = vld [vmem:[%s352 + $0xa8] sm:$0xf]
        %v1344 = vld [vmem:[%s352 + $0xac] sm:$0xf]
        %v1345 = vld [vmem:[%s352 + $0xb0] sm:$0xf]
        %v1346 = vld [vmem:[%s352 + $0xb4] sm:$0xf]
        %v1347 = vld [vmem:[%s352 + $0xb8] sm:$0xf]
        %v1348 = vld [vmem:[%s352 + $0xbc] sm:$0xf]
        %v1349 = vld [vmem:[%s352 + $0xc0] sm:$0xf]
        %v1350 = vld [vmem:[%s352 + $0xc4] sm:$0xf]
        %v1351 = vld [vmem:[%s352 + $0xc8] sm:$0xf]
        %v1352 = vld [vmem:[%s352 + $0xcc] sm:$0xf]
        %v1353 = vld [vmem:[%s352 + $0xd0] sm:$0xf]
        %v1354 = vld [vmem:[%s352 + $0xd4] sm:$0xf]
        %v1355 = vld [vmem:[%s352 + $0xd8] sm:$0xf]
        %v1356 = vld [vmem:[%s352 + $0xdc] sm:$0xf]
        %v1357 = vld [vmem:[%s352 + $0xe0] sm:$0xf]
        %v1358 = vld [vmem:[%s352 + $0xe4] sm:$0xf]
        %v1359 = vld [vmem:[%s352 + $0xe8] sm:$0xf]
        %v1360 = vld [vmem:[%s352 + $0xec] sm:$0xf]
        %v1361 = vld [vmem:[%s352 + $0xf0] sm:$0xf]
        %v1362 = vld [vmem:[%s352 + $0xf4] sm:$0xf]
        %v1363 = vld [vmem:[%s352 + $0xf8] sm:$0xf]
        %v1364 = vld [vmem:[%s352 + $0xfc] sm:$0xf]
        %v1429 = vunpack.c.l.b16 %v1301
        %v1430 = vunpack.c.l.b16 %v1302
        %v1431 = vunpack.c.l.b16 %v1303
        %v1432 = vunpack.c.l.b16 %v1304
        %v1433 = vunpack.c.l.b16 %v1305
        %v1434 = vunpack.c.l.b16 %v1306
        %v1435 = vunpack.c.l.b16 %v1307
        %v1436 = vunpack.c.l.b16 %v1308
        %v1437 = vunpack.c.l.b16 %v1309
        %v1438 = vunpack.c.l.b16 %v1310
        %v1439 = vunpack.c.l.b16 %v1311
        %v1440 = vunpack.c.l.b16 %v1312
        %v1441 = vunpack.c.l.b16 %v1313
        %v1442 = vunpack.c.l.b16 %v1314
        %v1443 = vunpack.c.l.b16 %v1315
        %v1444 = vunpack.c.l.b16 %v1316
        %v1445 = vunpack.c.l.b16 %v1317
        %v1446 = vunpack.c.l.b16 %v1318
        %v1447 = vunpack.c.l.b16 %v1319
        %v1448 = vunpack.c.l.b16 %v1320
        %v1449 = vunpack.c.l.b16 %v1321
        %v1450 = vunpack.c.l.b16 %v1322
        %v1451 = vunpack.c.l.b16 %v1323
        %v1452 = vunpack.c.l.b16 %v1324
        %v1453 = vunpack.c.l.b16 %v1325
        %v1454 = vunpack.c.l.b16 %v1326
        %v1455 = vunpack.c.l.b16 %v1327
        %v1456 = vunpack.c.l.b16 %v1328
        %v1457 = vunpack.c.l.b16 %v1329
        %v1458 = vunpack.c.l.b16 %v1330
        %v1459 = vunpack.c.l.b16 %v1331
        %v1460 = vunpack.c.l.b16 %v1332
        %v1461 = vunpack.c.l.b16 %v1333
        %v1462 = vunpack.c.l.b16 %v1334
        %v1463 = vunpack.c.l.b16 %v1335
        %v1464 = vunpack.c.l.b16 %v1336
        %v1465 = vunpack.c.l.b16 %v1337
        %v1466 = vunpack.c.l.b16 %v1338
        %v1467 = vunpack.c.l.b16 %v1339
        %v1468 = vunpack.c.l.b16 %v1340
        %v1469 = vunpack.c.l.b16 %v1341
        %v1470 = vunpack.c.l.b16 %v1342
        %v1471 = vunpack.c.l.b16 %v1343
        %v1472 = vunpack.c.l.b16 %v1344
        %v1473 = vunpack.c.l.b16 %v1345
        %v1474 = vunpack.c.l.b16 %v1346
        %v1475 = vunpack.c.l.b16 %v1347
        %v1476 = vunpack.c.l.b16 %v1348
        %v1477 = vunpack.c.l.b16 %v1349
        %v1478 = vunpack.c.l.b16 %v1350
        %v1479 = vunpack.c.l.b16 %v1351
        %v1480 = vunpack.c.l.b16 %v1352
        %v1481 = vunpack.c.l.b16 %v1353
        %v1482 = vunpack.c.l.b16 %v1354
        %v1483 = vunpack.c.l.b16 %v1355
        %v1484 = vunpack.c.l.b16 %v1356
        %v1485 = vunpack.c.l.b16 %v1357
        %v1486 = vunpack.c.l.b16 %v1358
        %v1487 = vunpack.c.l.b16 %v1359
        %v1488 = vunpack.c.l.b16 %v1360
        %v1489 = vunpack.c.l.b16 %v1361
        %v1490 = vunpack.c.l.b16 %v1362
        %v1491 = vunpack.c.l.b16 %v1363
        %v1492 = vunpack.c.l.b16 %v1364
        %v1493 = vpack.c.b16 %v1430, %v1429
        %v1494 = vpack.c.b16 %v1432, %v1431
        %v1495 = vpack.c.b16 %v1434, %v1433
        %v1496 = vpack.c.b16 %v1436, %v1435
        %v1497 = vpack.c.b16 %v1438, %v1437
        %v1498 = vpack.c.b16 %v1440, %v1439
        %v1499 = vpack.c.b16 %v1442, %v1441
        %v1500 = vpack.c.b16 %v1444, %v1443
        %v1501 = vpack.c.b16 %v1446, %v1445
        %v1502 = vpack.c.b16 %v1448, %v1447
        %v1503 = vpack.c.b16 %v1450, %v1449
        %v1504 = vpack.c.b16 %v1452, %v1451
        %v1505 = vpack.c.b16 %v1454, %v1453
        %v1506 = vpack.c.b16 %v1456, %v1455
        %v1507 = vpack.c.b16 %v1458, %v1457
        %v1508 = vpack.c.b16 %v1460, %v1459
        %v1509 = vpack.c.b16 %v1462, %v1461
        %v1510 = vpack.c.b16 %v1464, %v1463
        %v1511 = vpack.c.b16 %v1466, %v1465
        %v1512 = vpack.c.b16 %v1468, %v1467
        %v1513 = vpack.c.b16 %v1470, %v1469
        %v1514 = vpack.c.b16 %v1472, %v1471
        %v1515 = vpack.c.b16 %v1474, %v1473
        %v1516 = vpack.c.b16 %v1476, %v1475
        %v1517 = vpack.c.b16 %v1478, %v1477
        %v1518 = vpack.c.b16 %v1480, %v1479
        %v1519 = vpack.c.b16 %v1482, %v1481
        %v1520 = vpack.c.b16 %v1484, %v1483
        %v1521 = vpack.c.b16 %v1486, %v1485
        %v1522 = vpack.c.b16 %v1488, %v1487
        %v1523 = vpack.c.b16 %v1490, %v1489
        %v1524 = vpack.c.b16 %v1492, %v1491
        %1557 = vmatpush.bf16.msra.mxu0 %v1500
        %1558 = vmatpush.bf16.msra.mxu0 %v1499
        %1559 = vmatpush.bf16.msra.mxu0 %v1498
        %1560 = vmatpush.bf16.msra.mxu0 %v1497
        %1561 = vmatpush.bf16.msra.mxu0 %v1496
        %1562 = vmatpush.bf16.msra.mxu0 %v1495
        %1563 = vmatpush.bf16.msra.mxu0 %v1494
        %1564 = vmatpush.bf16.msra.mxu0 %v1493
        %1565 = vmatmul.bf16.gmra.mxu0 %v1237
        %v1566 = vpop.f32.mrf.mxu0
        %v1567 = vadd.f32 0.0, %v1566
        %v1568 = vpop.f32.mrf.mxu0
        %v1569 = vadd.f32 0.0, %v1568
        %1570 = vmatmul.bf16.gmra.mxu0 %v1241
        %v1571 = vpop.f32.mrf.mxu0
        %v1572 = vadd.f32 0.0, %v1571
        %v1573 = vpop.f32.mrf.mxu0
        %v1574 = vadd.f32 0.0, %v1573
        %1575 = vmatmul.bf16.gmra.mxu0 %v1245
        %v1576 = vpop.f32.mrf.mxu0
        %v1577 = vadd.f32 0.0, %v1576
        %v1578 = vpop.f32.mrf.mxu0
        %v1579 = vadd.f32 0.0, %v1578
        %1580 = vmatmul.bf16.gmra.mxu0 %v1249
        %v1581 = vpop.f32.mrf.mxu0
        %v1582 = vadd.f32 0.0, %v1581
        %v1583 = vpop.f32.mrf.mxu0
        %v1584 = vadd.f32 0.0, %v1583
        %1585 = vmatmul.bf16.gmra.mxu0 %v1253
        %v1586 = vpop.f32.mrf.mxu0
        %v1587 = vadd.f32 0.0, %v1586
        %v1588 = vpop.f32.mrf.mxu0
        %v1589 = vadd.f32 0.0, %v1588
        %1590 = vmatmul.bf16.gmra.mxu0 %v1257
        %v1591 = vpop.f32.mrf.mxu0
        %v1592 = vadd.f32 0.0, %v1591
        %v1593 = vpop.f32.mrf.mxu0
        %v1594 = vadd.f32 0.0, %v1593
        %1595 = vmatmul.bf16.gmra.mxu0 %v1261
        %v1596 = vpop.f32.mrf.mxu0
        %v1597 = vadd.f32 0.0, %v1596
        %v1598 = vpop.f32.mrf.mxu0
        %v1599 = vadd.f32 0.0, %v1598
        %1600 = vmatmul.bf16.gmra.mxu0 %v1265
        %v1601 = vpop.f32.mrf.mxu0
        %v1602 = vadd.f32 0.0, %v1601
        %v1603 = vpop.f32.mrf.mxu0
        %v1604 = vadd.f32 0.0, %v1603
        %1605 = vmatmul.bf16.gmra.mxu0 %v1269
        %v1606 = vpop.f32.mrf.mxu0
        %v1607 = vadd.f32 0.0, %v1606
        %v1608 = vpop.f32.mrf.mxu0
        %v1609 = vadd.f32 0.0, %v1608
        %1610 = vmatmul.bf16.gmra.mxu0 %v1273
        %v1611 = vpop.f32.mrf.mxu0
        %v1612 = vadd.f32 0.0, %v1611
        %v1613 = vpop.f32.mrf.mxu0
        %v1614 = vadd.f32 0.0, %v1613
        %1615 = vmatmul.bf16.gmra.mxu0 %v1277
        %v1616 = vpop.f32.mrf.mxu0
        %v1617 = vadd.f32 0.0, %v1616
        %v1618 = vpop.f32.mrf.mxu0
        %v1619 = vadd.f32 0.0, %v1618
        %1620 = vmatmul.bf16.gmra.mxu0 %v1281
        %v1621 = vpop.f32.mrf.mxu0
        %v1622 = vadd.f32 0.0, %v1621
        %v1623 = vpop.f32.mrf.mxu0
        %v1624 = vadd.f32 0.0, %v1623
        %1625 = vmatmul.bf16.gmra.mxu0 %v1285
        %v1626 = vpop.f32.mrf.mxu0
        %v1627 = vadd.f32 0.0, %v1626
        %v1628 = vpop.f32.mrf.mxu0
        %v1629 = vadd.f32 0.0, %v1628
        %1630 = vmatmul.bf16.gmra.mxu0 %v1289
        %v1631 = vpop.f32.mrf.mxu0
        %v1632 = vadd.f32 0.0, %v1631
        %v1633 = vpop.f32.mrf.mxu0
        %v1634 = vadd.f32 0.0, %v1633
        %1635 = vmatmul.bf16.gmra.mxu0 %v1293
        %v1636 = vpop.f32.mrf.mxu0
        %v1637 = vadd.f32 0.0, %v1636
        %v1638 = vpop.f32.mrf.mxu0
        %v1639 = vadd.f32 0.0, %v1638
        %1640 = vmatmul.bf16.gmra.mxu0 %v1297
        %v1641 = vpop.f32.mrf.mxu0
        %v1642 = vadd.f32 0.0, %v1641
        %v1643 = vpop.f32.mrf.mxu0
        %v1644 = vadd.f32 0.0, %v1643
        %1645 = vdwg.mxu0
        %1646 = vmatpush.bf16.msra.mxu0 %v1508
        %1647 = vmatpush.bf16.msra.mxu0 %v1507
        %1648 = vmatpush.bf16.msra.mxu0 %v1506
        %1649 = vmatpush.bf16.msra.mxu0 %v1505
        %1650 = vmatpush.bf16.msra.mxu0 %v1504
        %1651 = vmatpush.bf16.msra.mxu0 %v1503
        %1652 = vmatpush.bf16.msra.mxu0 %v1502
        %1653 = vmatpush.bf16.msra.mxu0 %v1501
        %1654 = vmatmul.bf16.gmra.mxu0 %v1238
        %v1655 = vpop.f32.mrf.mxu0
        %v1656 = vadd.f32 %v1567, %v1655
        %v1657 = vpop.f32.mrf.mxu0
        %v1658 = vadd.f32 %v1569, %v1657
        %1659 = vmatmul.bf16.gmra.mxu0 %v1242
        %v1660 = vpop.f32.mrf.mxu0
        %v1661 = vadd.f32 %v1572, %v1660
        %v1662 = vpop.f32.mrf.mxu0
        %v1663 = vadd.f32 %v1574, %v1662
        %1664 = vmatmul.bf16.gmra.mxu0 %v1246
        %v1665 = vpop.f32.mrf.mxu0
        %v1666 = vadd.f32 %v1577, %v1665
        %v1667 = vpop.f32.mrf.mxu0
        %v1668 = vadd.f32 %v1579, %v1667
        %1669 = vmatmul.bf16.gmra.mxu0 %v1250
        %v1670 = vpop.f32.mrf.mxu0
        %v1671 = vadd.f32 %v1582, %v1670
        %v1672 = vpop.f32.mrf.mxu0
        %v1673 = vadd.f32 %v1584, %v1672
        %1674 = vmatmul.bf16.gmra.mxu0 %v1254
        %v1675 = vpop.f32.mrf.mxu0
        %v1676 = vadd.f32 %v1587, %v1675
        %v1677 = vpop.f32.mrf.mxu0
        %v1678 = vadd.f32 %v1589, %v1677
        %1679 = vmatmul.bf16.gmra.mxu0 %v1258
        %v1680 = vpop.f32.mrf.mxu0
        %v1681 = vadd.f32 %v1592, %v1680
        %v1682 = vpop.f32.mrf.mxu0
        %v1683 = vadd.f32 %v1594, %v1682
        %1684 = vmatmul.bf16.gmra.mxu0 %v1262
        %v1685 = vpop.f32.mrf.mxu0
        %v1686 = vadd.f32 %v1597, %v1685
        %v1687 = vpop.f32.mrf.mxu0
        %v1688 = vadd.f32 %v1599, %v1687
        %1689 = vmatmul.bf16.gmra.mxu0 %v1266
        %v1690 = vpop.f32.mrf.mxu0
        %v1691 = vadd.f32 %v1602, %v1690
        %v1692 = vpop.f32.mrf.mxu0
        %v1693 = vadd.f32 %v1604, %v1692
        %1694 = vmatmul.bf16.gmra.mxu0 %v1270
        %v1695 = vpop.f32.mrf.mxu0
        %v1696 = vadd.f32 %v1607, %v1695
        %v1697 = vpop.f32.mrf.mxu0
        %v1698 = vadd.f32 %v1609, %v1697
        %1699 = vmatmul.bf16.gmra.mxu0 %v1274
        %v1700 = vpop.f32.mrf.mxu0
        %v1701 = vadd.f32 %v1612, %v1700
        %v1702 = vpop.f32.mrf.mxu0
        %v1703 = vadd.f32 %v1614, %v1702
        %1704 = vmatmul.bf16.gmra.mxu0 %v1278
        %v1705 = vpop.f32.mrf.mxu0
        %v1706 = vadd.f32 %v1617, %v1705
        %v1707 = vpop.f32.mrf.mxu0
        %v1708 = vadd.f32 %v1619, %v1707
        %1709 = vmatmul.bf16.gmra.mxu0 %v1282
        %v1710 = vpop.f32.mrf.mxu0
        %v1711 = vadd.f32 %v1622, %v1710
        %v1712 = vpop.f32.mrf.mxu0
        %v1713 = vadd.f32 %v1624, %v1712
        %1714 = vmatmul.bf16.gmra.mxu0 %v1286
        %v1715 = vpop.f32.mrf.mxu0
        %v1716 = vadd.f32 %v1627, %v1715
        %v1717 = vpop.f32.mrf.mxu0
        %v1718 = vadd.f32 %v1629, %v1717
        %1719 = vmatmul.bf16.gmra.mxu0 %v1290
        %v1720 = vpop.f32.mrf.mxu0
        %v1721 = vadd.f32 %v1632, %v1720
        %v1722 = vpop.f32.mrf.mxu0
        %v1723 = vadd.f32 %v1634, %v1722
        %1724 = vmatmul.bf16.gmra.mxu0 %v1294
        %v1725 = vpop.f32.mrf.mxu0
        %v1726 = vadd.f32 %v1637, %v1725
        %v1727 = vpop.f32.mrf.mxu0
        %v1728 = vadd.f32 %v1639, %v1727
        %1729 = vmatmul.bf16.gmra.mxu0 %v1298
        %v1730 = vpop.f32.mrf.mxu0
        %v1731 = vadd.f32 %v1642, %v1730
        %v1732 = vpop.f32.mrf.mxu0
        %v1733 = vadd.f32 %v1644, %v1732
        %1734 = vdwg.mxu0
        %1735 = vmatpush.bf16.msra.mxu0 %v1516
        %1736 = vmatpush.bf16.msra.mxu0 %v1515
        %1737 = vmatpush.bf16.msra.mxu0 %v1514
        %1738 = vmatpush.bf16.msra.mxu0 %v1513
        %1739 = vmatpush.bf16.msra.mxu0 %v1512
        %1740 = vmatpush.bf16.msra.mxu0 %v1511
        %1741 = vmatpush.bf16.msra.mxu0 %v1510
        %1742 = vmatpush.bf16.msra.mxu0 %v1509
        %1743 = vmatmul.bf16.gmra.mxu0 %v1239
        %v1744 = vpop.f32.mrf.mxu0
        %v1745 = vadd.f32 %v1656, %v1744
        %v1746 = vpop.f32.mrf.mxu0
        %v1747 = vadd.f32 %v1658, %v1746
        %1748 = vmatmul.bf16.gmra.mxu0 %v1243
        %v1749 = vpop.f32.mrf.mxu0
        %v1750 = vadd.f32 %v1661, %v1749
        %v1751 = vpop.f32.mrf.mxu0
        %v1752 = vadd.f32 %v1663, %v1751
        %1753 = vmatmul.bf16.gmra.mxu0 %v1247
        %v1754 = vpop.f32.mrf.mxu0
        %v1755 = vadd.f32 %v1666, %v1754
        %v1756 = vpop.f32.mrf.mxu0
        %v1757 = vadd.f32 %v1668, %v1756
        %1758 = vmatmul.bf16.gmra.mxu0 %v1251
        %v1759 = vpop.f32.mrf.mxu0
        %v1760 = vadd.f32 %v1671, %v1759
        %v1761 = vpop.f32.mrf.mxu0
        %v1762 = vadd.f32 %v1673, %v1761
        %1763 = vmatmul.bf16.gmra.mxu0 %v1255
        %v1764 = vpop.f32.mrf.mxu0
        %v1765 = vadd.f32 %v1676, %v1764
        %v1766 = vpop.f32.mrf.mxu0
        %v1767 = vadd.f32 %v1678, %v1766
        %1768 = vmatmul.bf16.gmra.mxu0 %v1259
        %v1769 = vpop.f32.mrf.mxu0
        %v1770 = vadd.f32 %v1681, %v1769
        %v1771 = vpop.f32.mrf.mxu0
        %v1772 = vadd.f32 %v1683, %v1771
        %1773 = vmatmul.bf16.gmra.mxu0 %v1263
        %v1774 = vpop.f32.mrf.mxu0
        %v1775 = vadd.f32 %v1686, %v1774
        %v1776 = vpop.f32.mrf.mxu0
        %v1777 = vadd.f32 %v1688, %v1776
        %1778 = vmatmul.bf16.gmra.mxu0 %v1267
        %v1779 = vpop.f32.mrf.mxu0
        %v1780 = vadd.f32 %v1691, %v1779
        %v1781 = vpop.f32.mrf.mxu0
        %v1782 = vadd.f32 %v1693, %v1781
        %1783 = vmatmul.bf16.gmra.mxu0 %v1271
        %v1784 = vpop.f32.mrf.mxu0
        %v1785 = vadd.f32 %v1696, %v1784
        %v1786 = vpop.f32.mrf.mxu0
        %v1787 = vadd.f32 %v1698, %v1786
        %1788 = vmatmul.bf16.gmra.mxu0 %v1275
        %v1789 = vpop.f32.mrf.mxu0
        %v1790 = vadd.f32 %v1701, %v1789
        %v1791 = vpop.f32.mrf.mxu0
        %v1792 = vadd.f32 %v1703, %v1791
        %1793 = vmatmul.bf16.gmra.mxu0 %v1279
        %v1794 = vpop.f32.mrf.mxu0
        %v1795 = vadd.f32 %v1706, %v1794
        %v1796 = vpop.f32.mrf.mxu0
        %v1797 = vadd.f32 %v1708, %v1796
        %1798 = vmatmul.bf16.gmra.mxu0 %v1283
        %v1799 = vpop.f32.mrf.mxu0
        %v1800 = vadd.f32 %v1711, %v1799
        %v1801 = vpop.f32.mrf.mxu0
        %v1802 = vadd.f32 %v1713, %v1801
        %1803 = vmatmul.bf16.gmra.mxu0 %v1287
        %v1804 = vpop.f32.mrf.mxu0
        %v1805 = vadd.f32 %v1716, %v1804
        %v1806 = vpop.f32.mrf.mxu0
        %v1807 = vadd.f32 %v1718, %v1806
        %1808 = vmatmul.bf16.gmra.mxu0 %v1291
        %v1809 = vpop.f32.mrf.mxu0
        %v1810 = vadd.f32 %v1721, %v1809
        %v1811 = vpop.f32.mrf.mxu0
        %v1812 = vadd.f32 %v1723, %v1811
        %1813 = vmatmul.bf16.gmra.mxu0 %v1295
        %v1814 = vpop.f32.mrf.mxu0
        %v1815 = vadd.f32 %v1726, %v1814
        %v1816 = vpop.f32.mrf.mxu0
        %v1817 = vadd.f32 %v1728, %v1816
        %1818 = vmatmul.bf16.gmra.mxu0 %v1299
        %v1819 = vpop.f32.mrf.mxu0
        %v1820 = vadd.f32 %v1731, %v1819
        %v1821 = vpop.f32.mrf.mxu0
        %v1822 = vadd.f32 %v1733, %v1821
        %1823 = vdwg.mxu0
        %1824 = vmatpush.bf16.msra.mxu0 %v1524
        %1825 = vmatpush.bf16.msra.mxu0 %v1523
        %1826 = vmatpush.bf16.msra.mxu0 %v1522
        %1827 = vmatpush.bf16.msra.mxu0 %v1521
        %1828 = vmatpush.bf16.msra.mxu0 %v1520
        %1829 = vmatpush.bf16.msra.mxu0 %v1519
        %1830 = vmatpush.bf16.msra.mxu0 %v1518
        %1831 = vmatpush.bf16.msra.mxu0 %v1517
        %1832 = vmatmul.bf16.gmra.mxu0 %v1240
        %v1833 = vpop.f32.mrf.mxu0
        %v1834 = vadd.f32 %v1745, %v1833
        %v1835 = vpop.f32.mrf.mxu0
        %v1836 = vadd.f32 %v1747, %v1835
        %1837 = vmatmul.bf16.gmra.mxu0 %v1244
        %v1838 = vpop.f32.mrf.mxu0
        %v1839 = vadd.f32 %v1750, %v1838
        %v1840 = vpop.f32.mrf.mxu0
        %v1841 = vadd.f32 %v1752, %v1840
        %1842 = vmatmul.bf16.gmra.mxu0 %v1248
        %v1843 = vpop.f32.mrf.mxu0
        %v1844 = vadd.f32 %v1755, %v1843
        %v1845 = vpop.f32.mrf.mxu0
        %v1846 = vadd.f32 %v1757, %v1845
        %1847 = vmatmul.bf16.gmra.mxu0 %v1252
        %v1848 = vpop.f32.mrf.mxu0
        %v1849 = vadd.f32 %v1760, %v1848
        %v1850 = vpop.f32.mrf.mxu0
        %v1851 = vadd.f32 %v1762, %v1850
        %1852 = vmatmul.bf16.gmra.mxu0 %v1256
        %v1853 = vpop.f32.mrf.mxu0
        %v1854 = vadd.f32 %v1765, %v1853
        %v1855 = vpop.f32.mrf.mxu0
        %v1856 = vadd.f32 %v1767, %v1855
        %1857 = vmatmul.bf16.gmra.mxu0 %v1260
        %v1858 = vpop.f32.mrf.mxu0
        %v1859 = vadd.f32 %v1770, %v1858
        %v1860 = vpop.f32.mrf.mxu0
        %v1861 = vadd.f32 %v1772, %v1860
        %1862 = vmatmul.bf16.gmra.mxu0 %v1264
        %v1863 = vpop.f32.mrf.mxu0
        %v1864 = vadd.f32 %v1775, %v1863
        %v1865 = vpop.f32.mrf.mxu0
        %v1866 = vadd.f32 %v1777, %v1865
        %1867 = vmatmul.bf16.gmra.mxu0 %v1268
        %v1868 = vpop.f32.mrf.mxu0
        %v1869 = vadd.f32 %v1780, %v1868
        %v1870 = vpop.f32.mrf.mxu0
        %v1871 = vadd.f32 %v1782, %v1870
        %1872 = vmatmul.bf16.gmra.mxu0 %v1272
        %v1873 = vpop.f32.mrf.mxu0
        %v1874 = vadd.f32 %v1785, %v1873
        %v1875 = vpop.f32.mrf.mxu0
        %v1876 = vadd.f32 %v1787, %v1875
        %1877 = vmatmul.bf16.gmra.mxu0 %v1276
        %v1878 = vpop.f32.mrf.mxu0
        %v1879 = vadd.f32 %v1790, %v1878
        %v1880 = vpop.f32.mrf.mxu0
        %v1881 = vadd.f32 %v1792, %v1880
        %1882 = vmatmul.bf16.gmra.mxu0 %v1280
        %v1883 = vpop.f32.mrf.mxu0
        %v1884 = vadd.f32 %v1795, %v1883
        %v1885 = vpop.f32.mrf.mxu0
        %v1886 = vadd.f32 %v1797, %v1885
        %1887 = vmatmul.bf16.gmra.mxu0 %v1284
        %v1888 = vpop.f32.mrf.mxu0
        %v1889 = vadd.f32 %v1800, %v1888
        %v1890 = vpop.f32.mrf.mxu0
        %v1891 = vadd.f32 %v1802, %v1890
        %1892 = vmatmul.bf16.gmra.mxu0 %v1288
        %v1893 = vpop.f32.mrf.mxu0
        %v1894 = vadd.f32 %v1805, %v1893
        %v1895 = vpop.f32.mrf.mxu0
        %v1896 = vadd.f32 %v1807, %v1895
        %1897 = vmatmul.bf16.gmra.mxu0 %v1292
        %v1898 = vpop.f32.mrf.mxu0
        %v1899 = vadd.f32 %v1810, %v1898
        %v1900 = vpop.f32.mrf.mxu0
        %v1901 = vadd.f32 %v1812, %v1900
        %1902 = vmatmul.bf16.gmra.mxu0 %v1296
        %v1903 = vpop.f32.mrf.mxu0
        %v1904 = vadd.f32 %v1815, %v1903
        %v1905 = vpop.f32.mrf.mxu0
        %v1906 = vadd.f32 %v1817, %v1905
        %1907 = vmatmul.bf16.gmra.mxu0 %v1300
        %v1908 = vpop.f32.mrf.mxu0
        %v1909 = vadd.f32 %v1820, %v1908
        %v1910 = vpop.f32.mrf.mxu0
        %v1911 = vadd.f32 %v1822, %v1910
        %1912 = vdwg.mxu0
        %v1913 = vadd.f32 %v1205, %v1834
        %v1914 = vadd.f32 %v1206, %v1836
        %v1915 = vadd.f32 %v1207, %v1839
        %v1916 = vadd.f32 %v1208, %v1841
        %v1917 = vadd.f32 %v1209, %v1844
        %v1918 = vadd.f32 %v1210, %v1846
        %v1919 = vadd.f32 %v1211, %v1849
        %v1920 = vadd.f32 %v1212, %v1851
        %v1921 = vadd.f32 %v1213, %v1854
        %v1922 = vadd.f32 %v1214, %v1856
        %v1923 = vadd.f32 %v1215, %v1859
        %v1924 = vadd.f32 %v1216, %v1861
        %v1925 = vadd.f32 %v1217, %v1864
        %v1926 = vadd.f32 %v1218, %v1866
        %v1927 = vadd.f32 %v1219, %v1869
        %v1928 = vadd.f32 %v1220, %v1871
        %v1929 = vadd.f32 %v1221, %v1874
        %v1930 = vadd.f32 %v1222, %v1876
        %v1931 = vadd.f32 %v1223, %v1879
        %v1932 = vadd.f32 %v1224, %v1881
        %v1933 = vadd.f32 %v1225, %v1884
        %v1934 = vadd.f32 %v1226, %v1886
        %v1935 = vadd.f32 %v1227, %v1889
        %v1936 = vadd.f32 %v1228, %v1891
        %v1937 = vadd.f32 %v1229, %v1894
        %v1938 = vadd.f32 %v1230, %v1896
        %v1939 = vadd.f32 %v1231, %v1899
        %v1940 = vadd.f32 %v1232, %v1901
        %v1941 = vadd.f32 %v1233, %v1904
        %v1942 = vadd.f32 %v1234, %v1906
        %v1943 = vadd.f32 %v1235, %v1909
        %v1944 = vadd.f32 %v1236, %v1911
        %1945 = vst [vmem:[#allocation2] sm:$0xff] %v1913
        %1946 = vst [vmem:[#allocation2 + $0x8] sm:$0xff] %v1914
        %1947 = vst [vmem:[#allocation2 + $0x10] sm:$0xff] %v1915
        %1948 = vst [vmem:[#allocation2 + $0x18] sm:$0xff] %v1916
        %1949 = vst [vmem:[#allocation2 + $0x20] sm:$0xff] %v1917
        %1950 = vst [vmem:[#allocation2 + $0x28] sm:$0xff] %v1918
        %1951 = vst [vmem:[#allocation2 + $0x30] sm:$0xff] %v1919
        %1952 = vst [vmem:[#allocation2 + $0x38] sm:$0xff] %v1920
        %1953 = vst [vmem:[#allocation2 + $0x40] sm:$0xff] %v1921
        %1954 = vst [vmem:[#allocation2 + $0x48] sm:$0xff] %v1922
        %1955 = vst [vmem:[#allocation2 + $0x50] sm:$0xff] %v1923
        %1956 = vst [vmem:[#allocation2 + $0x58] sm:$0xff] %v1924
        %1957 = vst [vmem:[#allocation2 + $0x60] sm:$0xff] %v1925
        %1958 = vst [vmem:[#allocation2 + $0x68] sm:$0xff] %v1926
        %1959 = vst [vmem:[#allocation2 + $0x70] sm:$0xff] %v1927
        %1960 = vst [vmem:[#allocation2 + $0x78] sm:$0xff] %v1928
        %1961 = vst [vmem:[#allocation2 + $0x80] sm:$0xff] %v1929
        %1962 = vst [vmem:[#allocation2 + $0x88] sm:$0xff] %v1930
        %1963 = vst [vmem:[#allocation2 + $0x90] sm:$0xff] %v1931
        %1964 = vst [vmem:[#allocation2 + $0x98] sm:$0xff] %v1932
        %1965 = vst [vmem:[#allocation2 + $0xa0] sm:$0xff] %v1933
        %1966 = vst [vmem:[#allocation2 + $0xa8] sm:$0xff] %v1934
        %1967 = vst [vmem:[#allocation2 + $0xb0] sm:$0xff] %v1935
        %1968 = vst [vmem:[#allocation2 + $0xb8] sm:$0xff] %v1936
        %1969 = vst [vmem:[#allocation2 + $0xc0] sm:$0xff] %v1937
        %1970 = vst [vmem:[#allocation2 + $0xc8] sm:$0xff] %v1938
        %1971 = vst [vmem:[#allocation2 + $0xd0] sm:$0xff] %v1939
        %1972 = vst [vmem:[#allocation2 + $0xd8] sm:$0xff] %v1940
        %1973 = vst [vmem:[#allocation2 + $0xe0] sm:$0xff] %v1941
        %1974 = vst [vmem:[#allocation2 + $0xe8] sm:$0xff] %v1942
        %1975 = vst [vmem:[#allocation2 + $0xf0] sm:$0xff] %v1943
        %1976 = vst [vmem:[#allocation2 + $0xf8] sm:$0xff] %v1944
        // Predicated region
        $region53: #{poswise_ffn.1} parent=47 // pred_check
          %p1977 = pneg %p355
        $region54: #{poswise_ffn.1} parent=47 // pred_check_branch
          %1979 = sbr.rel (%p1977) target = $region56
        $region55: #{poswise_ffn.1} parent=47 // pred_region
          %v1980 = vld [vmem:[#allocation2] sm:$0xff]
          %v1981 = vld [vmem:[#allocation2 + $0x8] sm:$0xff]
          %v1982 = vld [vmem:[#allocation2 + $0x10] sm:$0xff]
          %v1983 = vld [vmem:[#allocation2 + $0x18] sm:$0xff]
          %v1984 = vld [vmem:[#allocation2 + $0x20] sm:$0xff]
          %v1985 = vld [vmem:[#allocation2 + $0x28] sm:$0xff]
          %v1986 = vld [vmem:[#allocation2 + $0x30] sm:$0xff]
          %v1987 = vld [vmem:[#allocation2 + $0x38] sm:$0xff]
          %v1988 = vld [vmem:[#allocation2 + $0x40] sm:$0xff]
          %v1989 = vld [vmem:[#allocation2 + $0x48] sm:$0xff]
          %v1990 = vld [vmem:[#allocation2 + $0x50] sm:$0xff]
          %v1991 = vld [vmem:[#allocation2 + $0x58] sm:$0xff]
          %v1992 = vld [vmem:[#allocation2 + $0x60] sm:$0xff]
          %v1993 = vld [vmem:[#allocation2 + $0x68] sm:$0xff]
          %v1994 = vld [vmem:[#allocation2 + $0x70] sm:$0xff]
          %v1995 = vld [vmem:[#allocation2 + $0x78] sm:$0xff]
          %v1996 = vld [vmem:[#allocation2 + $0x80] sm:$0xff]
          %v1997 = vld [vmem:[#allocation2 + $0x88] sm:$0xff]
          %v1998 = vld [vmem:[#allocation2 + $0x90] sm:$0xff]
          %v1999 = vld [vmem:[#allocation2 + $0x98] sm:$0xff]
          %v2000 = vld [vmem:[#allocation2 + $0xa0] sm:$0xff]
          %v2001 = vld [vmem:[#allocation2 + $0xa8] sm:$0xff]
          %v2002 = vld [vmem:[#allocation2 + $0xb0] sm:$0xff]
          %v2003 = vld [vmem:[#allocation2 + $0xb8] sm:$0xff]
          %v2004 = vld [vmem:[#allocation2 + $0xc0] sm:$0xff]
          %v2005 = vld [vmem:[#allocation2 + $0xc8] sm:$0xff]
          %v2006 = vld [vmem:[#allocation2 + $0xd0] sm:$0xff]
          %v2007 = vld [vmem:[#allocation2 + $0xd8] sm:$0xff]
          %v2008 = vld [vmem:[#allocation2 + $0xe0] sm:$0xff]
          %v2009 = vld [vmem:[#allocation2 + $0xe8] sm:$0xff]
          %v2010 = vld [vmem:[#allocation2 + $0xf0] sm:$0xff]
          %v2011 = vld [vmem:[#allocation2 + $0xf8] sm:$0xff]
          %v2012 = vld [vmem:[%s4] sm:$0x1]
          %v2014 = vperm.slane %v2012, 0
          %v2016 = vadd.f32 %v1980, %v2014
          %v2017 = vadd.f32 %v1981, %v2014
          %v2018 = vadd.f32 %v1982, %v2014
          %v2019 = vadd.f32 %v1983, %v2014
          %v2020 = vadd.f32 %v1984, %v2014
          %v2021 = vadd.f32 %v1985, %v2014
          %v2022 = vadd.f32 %v1986, %v2014
          %v2023 = vadd.f32 %v1987, %v2014
          %v2024 = vadd.f32 %v1988, %v2014
          %v2025 = vadd.f32 %v1989, %v2014
          %v2026 = vadd.f32 %v1990, %v2014
          %v2027 = vadd.f32 %v1991, %v2014
          %v2028 = vadd.f32 %v1992, %v2014
          %v2029 = vadd.f32 %v1993, %v2014
          %v2030 = vadd.f32 %v1994, %v2014
          %v2031 = vadd.f32 %v1995, %v2014
          %v2032 = vadd.f32 %v1996, %v2014
          %v2033 = vadd.f32 %v1997, %v2014
          %v2034 = vadd.f32 %v1998, %v2014
          %v2035 = vadd.f32 %v1999, %v2014
          %v2036 = vadd.f32 %v2000, %v2014
          %v2037 = vadd.f32 %v2001, %v2014
          %v2038 = vadd.f32 %v2002, %v2014
          %v2039 = vadd.f32 %v2003, %v2014
          %v2040 = vadd.f32 %v2004, %v2014
          %v2041 = vadd.f32 %v2005, %v2014
          %v2042 = vadd.f32 %v2006, %v2014
          %v2043 = vadd.f32 %v2007, %v2014
          %v2044 = vadd.f32 %v2008, %v2014
          %v2045 = vadd.f32 %v2009, %v2014
          %v2046 = vadd.f32 %v2010, %v2014
          %v2047 = vadd.f32 %v2011, %v2014
          %v2048 = vunpack.c.l.bf16 %v391
          %v2049 = vunpack.c.l.bf16 %v392
          %v2050 = vunpack.c.l.bf16 %v393
          %v2051 = vunpack.c.l.bf16 %v394
          %v2052 = vunpack.c.l.bf16 %v395
          %v2053 = vunpack.c.l.bf16 %v396
          %v2054 = vunpack.c.l.bf16 %v397
          %v2055 = vunpack.c.l.bf16 %v398
          %v2056 = vunpack.c.l.bf16 %v399
          %v2057 = vunpack.c.l.bf16 %v400
          %v2058 = vunpack.c.l.bf16 %v401
          %v2059 = vunpack.c.l.bf16 %v402
          %v2060 = vunpack.c.l.bf16 %v403
          %v2061 = vunpack.c.l.bf16 %v404
          %v2062 = vunpack.c.l.bf16 %v405
          %v2063 = vunpack.c.l.bf16 %v406
          %v2064 = vunpack.c.l.bf16 %v407
          %v2065 = vunpack.c.l.bf16 %v408
          %v2066 = vunpack.c.l.bf16 %v409
          %v2067 = vunpack.c.l.bf16 %v410
          %v2068 = vunpack.c.l.bf16 %v411
          %v2069 = vunpack.c.l.bf16 %v412
          %v2070 = vunpack.c.l.bf16 %v413
          %v2071 = vunpack.c.l.bf16 %v414
          %v2072 = vunpack.c.l.bf16 %v415
          %v2073 = vunpack.c.l.bf16 %v416
          %v2074 = vunpack.c.l.bf16 %v417
          %v2075 = vunpack.c.l.bf16 %v418
          %v2076 = vunpack.c.l.bf16 %v419
          %v2077 = vunpack.c.l.bf16 %v420
          %v2078 = vunpack.c.l.bf16 %v421
          %v2079 = vunpack.c.l.bf16 %v422
          %v2080 = vadd.f32 %v2016, %v2048
          %v2081 = vadd.f32 %v2017, %v2049
          %v2082 = vadd.f32 %v2018, %v2050
          %v2083 = vadd.f32 %v2019, %v2051
          %v2084 = vadd.f32 %v2020, %v2052
          %v2085 = vadd.f32 %v2021, %v2053
          %v2086 = vadd.f32 %v2022, %v2054
          %v2087 = vadd.f32 %v2023, %v2055
          %v2088 = vadd.f32 %v2024, %v2056
          %v2089 = vadd.f32 %v2025, %v2057
          %v2090 = vadd.f32 %v2026, %v2058
          %v2091 = vadd.f32 %v2027, %v2059
          %v2092 = vadd.f32 %v2028, %v2060
          %v2093 = vadd.f32 %v2029, %v2061
          %v2094 = vadd.f32 %v2030, %v2062
          %v2095 = vadd.f32 %v2031, %v2063
          %v2096 = vadd.f32 %v2032, %v2064
          %v2097 = vadd.f32 %v2033, %v2065
          %v2098 = vadd.f32 %v2034, %v2066
          %v2099 = vadd.f32 %v2035, %v2067
          %v2100 = vadd.f32 %v2036, %v2068
          %v2101 = vadd.f32 %v2037, %v2069
          %v2102 = vadd.f32 %v2038, %v2070
          %v2103 = vadd.f32 %v2039, %v2071
          %v2104 = vadd.f32 %v2040, %v2072
          %v2105 = vadd.f32 %v2041, %v2073
          %v2106 = vadd.f32 %v2042, %v2074
          %v2107 = vadd.f32 %v2043, %v2075
          %v2108 = vadd.f32 %v2044, %v2076
          %v2109 = vadd.f32 %v2045, %v2077
          %v2110 = vadd.f32 %v2046, %v2078
          %v2111 = vadd.f32 %v2047, %v2079
          %2112 = vadd.xlane.f32.xlu0 %v2080
          %v2113 = vpop.xlane.xlu0 %2112
          %2114 = vadd.xlane.f32.xlu0 %v2081
          %v2115 = vpop.xlane.xlu0 %2114
          %2116 = vadd.xlane.f32.xlu0 %v2082
          %v2117 = vpop.xlane.xlu0 %2116
          %2118 = vadd.xlane.f32.xlu0 %v2083
          %v2119 = vpop.xlane.xlu0 %2118
          %2120 = vadd.xlane.f32.xlu0 %v2084
          %v2121 = vpop.xlane.xlu0 %2120
          %2122 = vadd.xlane.f32.xlu0 %v2085
          %v2123 = vpop.xlane.xlu0 %2122
          %2124 = vadd.xlane.f32.xlu0 %v2086
          %v2125 = vpop.xlane.xlu0 %2124
          %2126 = vadd.xlane.f32.xlu0 %v2087
          %v2127 = vpop.xlane.xlu0 %2126
          %2128 = vadd.xlane.f32.xlu0 %v2088
          %v2129 = vpop.xlane.xlu0 %2128
          %2130 = vadd.xlane.f32.xlu0 %v2089
          %v2131 = vpop.xlane.xlu0 %2130
          %2132 = vadd.xlane.f32.xlu0 %v2090
          %v2133 = vpop.xlane.xlu0 %2132
          %2134 = vadd.xlane.f32.xlu0 %v2091
          %v2135 = vpop.xlane.xlu0 %2134
          %2136 = vadd.xlane.f32.xlu0 %v2092
          %v2137 = vpop.xlane.xlu0 %2136
          %2138 = vadd.xlane.f32.xlu0 %v2093
          %v2139 = vpop.xlane.xlu0 %2138
          %2140 = vadd.xlane.f32.xlu0 %v2094
          %v2141 = vpop.xlane.xlu0 %2140
          %2142 = vadd.xlane.f32.xlu0 %v2095
          %v2143 = vpop.xlane.xlu0 %2142
          %2144 = vadd.xlane.f32.xlu0 %v2096
          %v2145 = vpop.xlane.xlu0 %2144
          %2146 = vadd.xlane.f32.xlu0 %v2097
          %v2147 = vpop.xlane.xlu0 %2146
          %2148 = vadd.xlane.f32.xlu0 %v2098
          %v2149 = vpop.xlane.xlu0 %2148
          %2150 = vadd.xlane.f32.xlu0 %v2099
          %v2151 = vpop.xlane.xlu0 %2150
          %2152 = vadd.xlane.f32.xlu0 %v2100
          %v2153 = vpop.xlane.xlu0 %2152
          %2154 = vadd.xlane.f32.xlu0 %v2101
          %v2155 = vpop.xlane.xlu0 %2154
          %2156 = vadd.xlane.f32.xlu0 %v2102
          %v2157 = vpop.xlane.xlu0 %2156
          %2158 = vadd.xlane.f32.xlu0 %v2103
          %v2159 = vpop.xlane.xlu0 %2158
          %2160 = vadd.xlane.f32.xlu0 %v2104
          %v2161 = vpop.xlane.xlu0 %2160
          %2162 = vadd.xlane.f32.xlu0 %v2105
          %v2163 = vpop.xlane.xlu0 %2162
          %2164 = vadd.xlane.f32.xlu0 %v2106
          %v2165 = vpop.xlane.xlu0 %2164
          %2166 = vadd.xlane.f32.xlu0 %v2107
          %v2167 = vpop.xlane.xlu0 %2166
          %2168 = vadd.xlane.f32.xlu0 %v2108
          %v2169 = vpop.xlane.xlu0 %2168
          %2170 = vadd.xlane.f32.xlu0 %v2109
          %v2171 = vpop.xlane.xlu0 %2170
          %2172 = vadd.xlane.f32.xlu0 %v2110
          %v2173 = vpop.xlane.xlu0 %2172
          %2174 = vadd.xlane.f32.xlu0 %v2111
          %v2175 = vpop.xlane.xlu0 %2174
          %v2176 = vmul.f32 %v2080, %v2080
          %v2177 = vmul.f32 %v2081, %v2081
          %v2178 = vmul.f32 %v2082, %v2082
          %v2179 = vmul.f32 %v2083, %v2083
          %v2180 = vmul.f32 %v2084, %v2084
          %v2181 = vmul.f32 %v2085, %v2085
          %v2182 = vmul.f32 %v2086, %v2086
          %v2183 = vmul.f32 %v2087, %v2087
          %v2184 = vmul.f32 %v2088, %v2088
          %v2185 = vmul.f32 %v2089, %v2089
          %v2186 = vmul.f32 %v2090, %v2090
          %v2187 = vmul.f32 %v2091, %v2091
          %v2188 = vmul.f32 %v2092, %v2092
          %v2189 = vmul.f32 %v2093, %v2093
          %v2190 = vmul.f32 %v2094, %v2094
          %v2191 = vmul.f32 %v2095, %v2095
          %v2192 = vmul.f32 %v2096, %v2096
          %v2193 = vmul.f32 %v2097, %v2097
          %v2194 = vmul.f32 %v2098, %v2098
          %v2195 = vmul.f32 %v2099, %v2099
          %v2196 = vmul.f32 %v2100, %v2100
          %v2197 = vmul.f32 %v2101, %v2101
          %v2198 = vmul.f32 %v2102, %v2102
          %v2199 = vmul.f32 %v2103, %v2103
          %v2200 = vmul.f32 %v2104, %v2104
          %v2201 = vmul.f32 %v2105, %v2105
          %v2202 = vmul.f32 %v2106, %v2106
          %v2203 = vmul.f32 %v2107, %v2107
          %v2204 = vmul.f32 %v2108, %v2108
          %v2205 = vmul.f32 %v2109, %v2109
          %v2206 = vmul.f32 %v2110, %v2110
          %v2207 = vmul.f32 %v2111, %v2111
          %2208 = vadd.xlane.f32.xlu0 %v2176
          %v2209 = vpop.xlane.xlu0 %2208
          %2210 = vadd.xlane.f32.xlu0 %v2177
          %v2211 = vpop.xlane.xlu0 %2210
          %2212 = vadd.xlane.f32.xlu0 %v2178
          %v2213 = vpop.xlane.xlu0 %2212
          %2214 = vadd.xlane.f32.xlu0 %v2179
          %v2215 = vpop.xlane.xlu0 %2214
          %2216 = vadd.xlane.f32.xlu0 %v2180
          %v2217 = vpop.xlane.xlu0 %2216
          %2218 = vadd.xlane.f32.xlu0 %v2181
          %v2219 = vpop.xlane.xlu0 %2218
          %2220 = vadd.xlane.f32.xlu0 %v2182
          %v2221 = vpop.xlane.xlu0 %2220
          %2222 = vadd.xlane.f32.xlu0 %v2183
          %v2223 = vpop.xlane.xlu0 %2222
          %2224 = vadd.xlane.f32.xlu0 %v2184
          %v2225 = vpop.xlane.xlu0 %2224
          %2226 = vadd.xlane.f32.xlu0 %v2185
          %v2227 = vpop.xlane.xlu0 %2226
          %2228 = vadd.xlane.f32.xlu0 %v2186
          %v2229 = vpop.xlane.xlu0 %2228
          %2230 = vadd.xlane.f32.xlu0 %v2187
          %v2231 = vpop.xlane.xlu0 %2230
          %2232 = vadd.xlane.f32.xlu0 %v2188
          %v2233 = vpop.xlane.xlu0 %2232
          %2234 = vadd.xlane.f32.xlu0 %v2189
          %v2235 = vpop.xlane.xlu0 %2234
          %2236 = vadd.xlane.f32.xlu0 %v2190
          %v2237 = vpop.xlane.xlu0 %2236
          %2238 = vadd.xlane.f32.xlu0 %v2191
          %v2239 = vpop.xlane.xlu0 %2238
          %2240 = vadd.xlane.f32.xlu0 %v2192
          %v2241 = vpop.xlane.xlu0 %2240
          %2242 = vadd.xlane.f32.xlu0 %v2193
          %v2243 = vpop.xlane.xlu0 %2242
          %2244 = vadd.xlane.f32.xlu0 %v2194
          %v2245 = vpop.xlane.xlu0 %2244
          %2246 = vadd.xlane.f32.xlu0 %v2195
          %v2247 = vpop.xlane.xlu0 %2246
          %2248 = vadd.xlane.f32.xlu0 %v2196
          %v2249 = vpop.xlane.xlu0 %2248
          %2250 = vadd.xlane.f32.xlu0 %v2197
          %v2251 = vpop.xlane.xlu0 %2250
          %2252 = vadd.xlane.f32.xlu0 %v2198
          %v2253 = vpop.xlane.xlu0 %2252
          %2254 = vadd.xlane.f32.xlu0 %v2199
          %v2255 = vpop.xlane.xlu0 %2254
          %2256 = vadd.xlane.f32.xlu0 %v2200
          %v2257 = vpop.xlane.xlu0 %2256
          %2258 = vadd.xlane.f32.xlu0 %v2201
          %v2259 = vpop.xlane.xlu0 %2258
          %2260 = vadd.xlane.f32.xlu0 %v2202
          %v2261 = vpop.xlane.xlu0 %2260
          %2262 = vadd.xlane.f32.xlu0 %v2203
          %v2263 = vpop.xlane.xlu0 %2262
          %2264 = vadd.xlane.f32.xlu0 %v2204
          %v2265 = vpop.xlane.xlu0 %2264
          %2266 = vadd.xlane.f32.xlu0 %v2205
          %v2267 = vpop.xlane.xlu0 %2266
          %2268 = vadd.xlane.f32.xlu0 %v2206
          %v2269 = vpop.xlane.xlu0 %2268
          %2270 = vadd.xlane.f32.xlu0 %v2207
          %v2271 = vpop.xlane.xlu0 %2270
          %v2272 = vmul.f32 %v2113, 0.0078125
          %v2273 = vmul.f32 %v2115, 0.0078125
          %v2274 = vmul.f32 %v2117, 0.0078125
          %v2275 = vmul.f32 %v2119, 0.0078125
          %v2276 = vmul.f32 %v2121, 0.0078125
          %v2277 = vmul.f32 %v2123, 0.0078125
          %v2278 = vmul.f32 %v2125, 0.0078125
          %v2279 = vmul.f32 %v2127, 0.0078125
          %v2280 = vmul.f32 %v2129, 0.0078125
          %v2281 = vmul.f32 %v2131, 0.0078125
          %v2282 = vmul.f32 %v2133, 0.0078125
          %v2283 = vmul.f32 %v2135, 0.0078125
          %v2284 = vmul.f32 %v2137, 0.0078125
          %v2285 = vmul.f32 %v2139, 0.0078125
          %v2286 = vmul.f32 %v2141, 0.0078125
          %v2287 = vmul.f32 %v2143, 0.0078125
          %v2288 = vmul.f32 %v2145, 0.0078125
          %v2289 = vmul.f32 %v2147, 0.0078125
          %v2290 = vmul.f32 %v2149, 0.0078125
          %v2291 = vmul.f32 %v2151, 0.0078125
          %v2292 = vmul.f32 %v2153, 0.0078125
          %v2293 = vmul.f32 %v2155, 0.0078125
          %v2294 = vmul.f32 %v2157, 0.0078125
          %v2295 = vmul.f32 %v2159, 0.0078125
          %v2296 = vmul.f32 %v2161, 0.0078125
          %v2297 = vmul.f32 %v2163, 0.0078125
          %v2298 = vmul.f32 %v2165, 0.0078125
          %v2299 = vmul.f32 %v2167, 0.0078125
          %v2300 = vmul.f32 %v2169, 0.0078125
          %v2301 = vmul.f32 %v2171, 0.0078125
          %v2302 = vmul.f32 %v2173, 0.0078125
          %v2303 = vmul.f32 %v2175, 0.0078125
          %v2304 = vmul.f32 %v2209, 0.0078125
          %v2305 = vmul.f32 %v2211, 0.0078125
          %v2306 = vmul.f32 %v2213, 0.0078125
          %v2307 = vmul.f32 %v2215, 0.0078125
          %v2308 = vmul.f32 %v2217, 0.0078125
          %v2309 = vmul.f32 %v2219, 0.0078125
          %v2310 = vmul.f32 %v2221, 0.0078125
          %v2311 = vmul.f32 %v2223, 0.0078125
          %v2312 = vmul.f32 %v2225, 0.0078125
          %v2313 = vmul.f32 %v2227, 0.0078125
          %v2314 = vmul.f32 %v2229, 0.0078125
          %v2315 = vmul.f32 %v2231, 0.0078125
          %v2316 = vmul.f32 %v2233, 0.0078125
          %v2317 = vmul.f32 %v2235, 0.0078125
          %v2318 = vmul.f32 %v2237, 0.0078125
          %v2319 = vmul.f32 %v2239, 0.0078125
          %v2320 = vmul.f32 %v2241, 0.0078125
          %v2321 = vmul.f32 %v2243, 0.0078125
          %v2322 = vmul.f32 %v2245, 0.0078125
          %v2323 = vmul.f32 %v2247, 0.0078125
          %v2324 = vmul.f32 %v2249, 0.0078125
          %v2325 = vmul.f32 %v2251, 0.0078125
          %v2326 = vmul.f32 %v2253, 0.0078125
          %v2327 = vmul.f32 %v2255, 0.0078125
          %v2328 = vmul.f32 %v2257, 0.0078125
          %v2329 = vmul.f32 %v2259, 0.0078125
          %v2330 = vmul.f32 %v2261, 0.0078125
          %v2331 = vmul.f32 %v2263, 0.0078125
          %v2332 = vmul.f32 %v2265, 0.0078125
          %v2333 = vmul.f32 %v2267, 0.0078125
          %v2334 = vmul.f32 %v2269, 0.0078125
          %v2335 = vmul.f32 %v2271, 0.0078125
          %v2336 = vmul.f32 %v2272, %v2272
          %v2337 = vmul.f32 %v2273, %v2273
          %v2338 = vmul.f32 %v2274, %v2274
          %v2339 = vmul.f32 %v2275, %v2275
          %v2340 = vmul.f32 %v2276, %v2276
          %v2341 = vmul.f32 %v2277, %v2277
          %v2342 = vmul.f32 %v2278, %v2278
          %v2343 = vmul.f32 %v2279, %v2279
          %v2344 = vmul.f32 %v2280, %v2280
          %v2345 = vmul.f32 %v2281, %v2281
          %v2346 = vmul.f32 %v2282, %v2282
          %v2347 = vmul.f32 %v2283, %v2283
          %v2348 = vmul.f32 %v2284, %v2284
          %v2349 = vmul.f32 %v2285, %v2285
          %v2350 = vmul.f32 %v2286, %v2286
          %v2351 = vmul.f32 %v2287, %v2287
          %v2352 = vmul.f32 %v2288, %v2288
          %v2353 = vmul.f32 %v2289, %v2289
          %v2354 = vmul.f32 %v2290, %v2290
          %v2355 = vmul.f32 %v2291, %v2291
          %v2356 = vmul.f32 %v2292, %v2292
          %v2357 = vmul.f32 %v2293, %v2293
          %v2358 = vmul.f32 %v2294, %v2294
          %v2359 = vmul.f32 %v2295, %v2295
          %v2360 = vmul.f32 %v2296, %v2296
          %v2361 = vmul.f32 %v2297, %v2297
          %v2362 = vmul.f32 %v2298, %v2298
          %v2363 = vmul.f32 %v2299, %v2299
          %v2364 = vmul.f32 %v2300, %v2300
          %v2365 = vmul.f32 %v2301, %v2301
          %v2366 = vmul.f32 %v2302, %v2302
          %v2367 = vmul.f32 %v2303, %v2303
          %v2368 = vsub.f32 %v2304, %v2336
          %v2369 = vsub.f32 %v2305, %v2337
          %v2370 = vsub.f32 %v2306, %v2338
          %v2371 = vsub.f32 %v2307, %v2339
          %v2372 = vsub.f32 %v2308, %v2340
          %v2373 = vsub.f32 %v2309, %v2341
          %v2374 = vsub.f32 %v2310, %v2342
          %v2375 = vsub.f32 %v2311, %v2343
          %v2376 = vsub.f32 %v2312, %v2344
          %v2377 = vsub.f32 %v2313, %v2345
          %v2378 = vsub.f32 %v2314, %v2346
          %v2379 = vsub.f32 %v2315, %v2347
          %v2380 = vsub.f32 %v2316, %v2348
          %v2381 = vsub.f32 %v2317, %v2349
          %v2382 = vsub.f32 %v2318, %v2350
          %v2383 = vsub.f32 %v2319, %v2351
          %v2384 = vsub.f32 %v2320, %v2352
          %v2385 = vsub.f32 %v2321, %v2353
          %v2386 = vsub.f32 %v2322, %v2354
          %v2387 = vsub.f32 %v2323, %v2355
          %v2388 = vsub.f32 %v2324, %v2356
          %v2389 = vsub.f32 %v2325, %v2357
          %v2390 = vsub.f32 %v2326, %v2358
          %v2391 = vsub.f32 %v2327, %v2359
          %v2392 = vsub.f32 %v2328, %v2360
          %v2393 = vsub.f32 %v2329, %v2361
          %v2394 = vsub.f32 %v2330, %v2362
          %v2395 = vsub.f32 %v2331, %v2363
          %v2396 = vsub.f32 %v2332, %v2364
          %v2397 = vsub.f32 %v2333, %v2365
          %v2398 = vsub.f32 %v2334, %v2366
          %v2399 = vsub.f32 %v2335, %v2367
          %v2400 = vadd.f32 %v2368, 1e-05
          %v2401 = vadd.f32 %v2369, 1e-05
          %v2402 = vadd.f32 %v2370, 1e-05
          %v2403 = vadd.f32 %v2371, 1e-05
          %v2404 = vadd.f32 %v2372, 1e-05
          %v2405 = vadd.f32 %v2373, 1e-05
          %v2406 = vadd.f32 %v2374, 1e-05
          %v2407 = vadd.f32 %v2375, 1e-05
          %v2408 = vadd.f32 %v2376, 1e-05
          %v2409 = vadd.f32 %v2377, 1e-05
          %v2410 = vadd.f32 %v2378, 1e-05
          %v2411 = vadd.f32 %v2379, 1e-05
          %v2412 = vadd.f32 %v2380, 1e-05
          %v2413 = vadd.f32 %v2381, 1e-05
          %v2414 = vadd.f32 %v2382, 1e-05
          %v2415 = vadd.f32 %v2383, 1e-05
          %v2416 = vadd.f32 %v2384, 1e-05
          %v2417 = vadd.f32 %v2385, 1e-05
          %v2418 = vadd.f32 %v2386, 1e-05
          %v2419 = vadd.f32 %v2387, 1e-05
          %v2420 = vadd.f32 %v2388, 1e-05
          %v2421 = vadd.f32 %v2389, 1e-05
          %v2422 = vadd.f32 %v2390, 1e-05
          %v2423 = vadd.f32 %v2391, 1e-05
          %v2424 = vadd.f32 %v2392, 1e-05
          %v2425 = vadd.f32 %v2393, 1e-05
          %v2426 = vadd.f32 %v2394, 1e-05
          %v2427 = vadd.f32 %v2395, 1e-05
          %v2428 = vadd.f32 %v2396, 1e-05
          %v2429 = vadd.f32 %v2397, 1e-05
          %v2430 = vadd.f32 %v2398, 1e-05
          %v2431 = vadd.f32 %v2399, 1e-05
          %v2432 = vrsqrt.pop %v2400
          %v2433 = vmul.f32 %v2432, %v2400
          %v2434 = vmul.f32 %v2433, %v2432
          %v2435 = vmul.f32 0.5, %v2434
          %v2436 = vsub.f32 1.5, %v2435
          %v2437 = vmul.f32 %v2432, %v2436
          %vm2438 = vweird.f32 %v2400
          %vm2439 = vweird.f32 %v2432
          %vm2440 = vmor %vm2438, %vm2439
          %v2441 = vsel %vm2440, %v2432, %v2437
          %v2442 = vrsqrt.pop %v2401
          %v2443 = vmul.f32 %v2442, %v2401
          %v2444 = vmul.f32 %v2443, %v2442
          %v2445 = vmul.f32 0.5, %v2444
          %v2446 = vsub.f32 1.5, %v2445
          %v2447 = vmul.f32 %v2442, %v2446
          %vm2448 = vweird.f32 %v2401
          %vm2449 = vweird.f32 %v2442
          %vm2450 = vmor %vm2448, %vm2449
          %v2451 = vsel %vm2450, %v2442, %v2447
          %v2452 = vrsqrt.pop %v2402
          %v2453 = vmul.f32 %v2452, %v2402
          %v2454 = vmul.f32 %v2453, %v2452
          %v2455 = vmul.f32 0.5, %v2454
          %v2456 = vsub.f32 1.5, %v2455
          %v2457 = vmul.f32 %v2452, %v2456
          %vm2458 = vweird.f32 %v2402
          %vm2459 = vweird.f32 %v2452
          %vm2460 = vmor %vm2458, %vm2459
          %v2461 = vsel %vm2460, %v2452, %v2457
          %v2462 = vrsqrt.pop %v2403
          %v2463 = vmul.f32 %v2462, %v2403
          %v2464 = vmul.f32 %v2463, %v2462
          %v2465 = vmul.f32 0.5, %v2464
          %v2466 = vsub.f32 1.5, %v2465
          %v2467 = vmul.f32 %v2462, %v2466
          %vm2468 = vweird.f32 %v2403
          %vm2469 = vweird.f32 %v2462
          %vm2470 = vmor %vm2468, %vm2469
          %v2471 = vsel %vm2470, %v2462, %v2467
          %v2472 = vrsqrt.pop %v2404
          %v2473 = vmul.f32 %v2472, %v2404
          %v2474 = vmul.f32 %v2473, %v2472
          %v2475 = vmul.f32 0.5, %v2474
          %v2476 = vsub.f32 1.5, %v2475
          %v2477 = vmul.f32 %v2472, %v2476
          %vm2478 = vweird.f32 %v2404
          %vm2479 = vweird.f32 %v2472
          %vm2480 = vmor %vm2478, %vm2479
          %v2481 = vsel %vm2480, %v2472, %v2477
          %v2482 = vrsqrt.pop %v2405
          %v2483 = vmul.f32 %v2482, %v2405
          %v2484 = vmul.f32 %v2483, %v2482
          %v2485 = vmul.f32 0.5, %v2484
          %v2486 = vsub.f32 1.5, %v2485
          %v2487 = vmul.f32 %v2482, %v2486
          %vm2488 = vweird.f32 %v2405
          %vm2489 = vweird.f32 %v2482
          %vm2490 = vmor %vm2488, %vm2489
          %v2491 = vsel %vm2490, %v2482, %v2487
          %v2492 = vrsqrt.pop %v2406
          %v2493 = vmul.f32 %v2492, %v2406
          %v2494 = vmul.f32 %v2493, %v2492
          %v2495 = vmul.f32 0.5, %v2494
          %v2496 = vsub.f32 1.5, %v2495
          %v2497 = vmul.f32 %v2492, %v2496
          %vm2498 = vweird.f32 %v2406
          %vm2499 = vweird.f32 %v2492
          %vm2500 = vmor %vm2498, %vm2499
          %v2501 = vsel %vm2500, %v2492, %v2497
          %v2502 = vrsqrt.pop %v2407
          %v2503 = vmul.f32 %v2502, %v2407
          %v2504 = vmul.f32 %v2503, %v2502
          %v2505 = vmul.f32 0.5, %v2504
          %v2506 = vsub.f32 1.5, %v2505
          %v2507 = vmul.f32 %v2502, %v2506
          %vm2508 = vweird.f32 %v2407
          %vm2509 = vweird.f32 %v2502
          %vm2510 = vmor %vm2508, %vm2509
          %v2511 = vsel %vm2510, %v2502, %v2507
          %v2512 = vrsqrt.pop %v2408
          %v2513 = vmul.f32 %v2512, %v2408
          %v2514 = vmul.f32 %v2513, %v2512
          %v2515 = vmul.f32 0.5, %v2514
          %v2516 = vsub.f32 1.5, %v2515
          %v2517 = vmul.f32 %v2512, %v2516
          %vm2518 = vweird.f32 %v2408
          %vm2519 = vweird.f32 %v2512
          %vm2520 = vmor %vm2518, %vm2519
          %v2521 = vsel %vm2520, %v2512, %v2517
          %v2522 = vrsqrt.pop %v2409
          %v2523 = vmul.f32 %v2522, %v2409
          %v2524 = vmul.f32 %v2523, %v2522
          %v2525 = vmul.f32 0.5, %v2524
          %v2526 = vsub.f32 1.5, %v2525
          %v2527 = vmul.f32 %v2522, %v2526
          %vm2528 = vweird.f32 %v2409
          %vm2529 = vweird.f32 %v2522
          %vm2530 = vmor %vm2528, %vm2529
          %v2531 = vsel %vm2530, %v2522, %v2527
          %v2532 = vrsqrt.pop %v2410
          %v2533 = vmul.f32 %v2532, %v2410
          %v2534 = vmul.f32 %v2533, %v2532
          %v2535 = vmul.f32 0.5, %v2534
          %v2536 = vsub.f32 1.5, %v2535
          %v2537 = vmul.f32 %v2532, %v2536
          %vm2538 = vweird.f32 %v2410
          %vm2539 = vweird.f32 %v2532
          %vm2540 = vmor %vm2538, %vm2539
          %v2541 = vsel %vm2540, %v2532, %v2537
          %v2542 = vrsqrt.pop %v2411
          %v2543 = vmul.f32 %v2542, %v2411
          %v2544 = vmul.f32 %v2543, %v2542
          %v2545 = vmul.f32 0.5, %v2544
          %v2546 = vsub.f32 1.5, %v2545
          %v2547 = vmul.f32 %v2542, %v2546
          %vm2548 = vweird.f32 %v2411
          %vm2549 = vweird.f32 %v2542
          %vm2550 = vmor %vm2548, %vm2549
          %v2551 = vsel %vm2550, %v2542, %v2547
          %v2552 = vrsqrt.pop %v2412
          %v2553 = vmul.f32 %v2552, %v2412
          %v2554 = vmul.f32 %v2553, %v2552
          %v2555 = vmul.f32 0.5, %v2554
          %v2556 = vsub.f32 1.5, %v2555
          %v2557 = vmul.f32 %v2552, %v2556
          %vm2558 = vweird.f32 %v2412
          %vm2559 = vweird.f32 %v2552
          %vm2560 = vmor %vm2558, %vm2559
          %v2561 = vsel %vm2560, %v2552, %v2557
          %v2562 = vrsqrt.pop %v2413
          %v2563 = vmul.f32 %v2562, %v2413
          %v2564 = vmul.f32 %v2563, %v2562
          %v2565 = vmul.f32 0.5, %v2564
          %v2566 = vsub.f32 1.5, %v2565
          %v2567 = vmul.f32 %v2562, %v2566
          %vm2568 = vweird.f32 %v2413
          %vm2569 = vweird.f32 %v2562
          %vm2570 = vmor %vm2568, %vm2569
          %v2571 = vsel %vm2570, %v2562, %v2567
          %v2572 = vrsqrt.pop %v2414
          %v2573 = vmul.f32 %v2572, %v2414
          %v2574 = vmul.f32 %v2573, %v2572
          %v2575 = vmul.f32 0.5, %v2574
          %v2576 = vsub.f32 1.5, %v2575
          %v2577 = vmul.f32 %v2572, %v2576
          %vm2578 = vweird.f32 %v2414
          %vm2579 = vweird.f32 %v2572
          %vm2580 = vmor %vm2578, %vm2579
          %v2581 = vsel %vm2580, %v2572, %v2577
          %v2582 = vrsqrt.pop %v2415
          %v2583 = vmul.f32 %v2582, %v2415
          %v2584 = vmul.f32 %v2583, %v2582
          %v2585 = vmul.f32 0.5, %v2584
          %v2586 = vsub.f32 1.5, %v2585
          %v2587 = vmul.f32 %v2582, %v2586
          %vm2588 = vweird.f32 %v2415
          %vm2589 = vweird.f32 %v2582
          %vm2590 = vmor %vm2588, %vm2589
          %v2591 = vsel %vm2590, %v2582, %v2587
          %v2592 = vrsqrt.pop %v2416
          %v2593 = vmul.f32 %v2592, %v2416
          %v2594 = vmul.f32 %v2593, %v2592
          %v2595 = vmul.f32 0.5, %v2594
          %v2596 = vsub.f32 1.5, %v2595
          %v2597 = vmul.f32 %v2592, %v2596
          %vm2598 = vweird.f32 %v2416
          %vm2599 = vweird.f32 %v2592
          %vm2600 = vmor %vm2598, %vm2599
          %v2601 = vsel %vm2600, %v2592, %v2597
          %v2602 = vrsqrt.pop %v2417
          %v2603 = vmul.f32 %v2602, %v2417
          %v2604 = vmul.f32 %v2603, %v2602
          %v2605 = vmul.f32 0.5, %v2604
          %v2606 = vsub.f32 1.5, %v2605
          %v2607 = vmul.f32 %v2602, %v2606
          %vm2608 = vweird.f32 %v2417
          %vm2609 = vweird.f32 %v2602
          %vm2610 = vmor %vm2608, %vm2609
          %v2611 = vsel %vm2610, %v2602, %v2607
          %v2612 = vrsqrt.pop %v2418
          %v2613 = vmul.f32 %v2612, %v2418
          %v2614 = vmul.f32 %v2613, %v2612
          %v2615 = vmul.f32 0.5, %v2614
          %v2616 = vsub.f32 1.5, %v2615
          %v2617 = vmul.f32 %v2612, %v2616
          %vm2618 = vweird.f32 %v2418
          %vm2619 = vweird.f32 %v2612
          %vm2620 = vmor %vm2618, %vm2619
          %v2621 = vsel %vm2620, %v2612, %v2617
          %v2622 = vrsqrt.pop %v2419
          %v2623 = vmul.f32 %v2622, %v2419
          %v2624 = vmul.f32 %v2623, %v2622
          %v2625 = vmul.f32 0.5, %v2624
          %v2626 = vsub.f32 1.5, %v2625
          %v2627 = vmul.f32 %v2622, %v2626
          %vm2628 = vweird.f32 %v2419
          %vm2629 = vweird.f32 %v2622
          %vm2630 = vmor %vm2628, %vm2629
          %v2631 = vsel %vm2630, %v2622, %v2627
          %v2632 = vrsqrt.pop %v2420
          %v2633 = vmul.f32 %v2632, %v2420
          %v2634 = vmul.f32 %v2633, %v2632
          %v2635 = vmul.f32 0.5, %v2634
          %v2636 = vsub.f32 1.5, %v2635
          %v2637 = vmul.f32 %v2632, %v2636
          %vm2638 = vweird.f32 %v2420
          %vm2639 = vweird.f32 %v2632
          %vm2640 = vmor %vm2638, %vm2639
          %v2641 = vsel %vm2640, %v2632, %v2637
          %v2642 = vrsqrt.pop %v2421
          %v2643 = vmul.f32 %v2642, %v2421
          %v2644 = vmul.f32 %v2643, %v2642
          %v2645 = vmul.f32 0.5, %v2644
          %v2646 = vsub.f32 1.5, %v2645
          %v2647 = vmul.f32 %v2642, %v2646
          %vm2648 = vweird.f32 %v2421
          %vm2649 = vweird.f32 %v2642
          %vm2650 = vmor %vm2648, %vm2649
          %v2651 = vsel %vm2650, %v2642, %v2647
          %v2652 = vrsqrt.pop %v2422
          %v2653 = vmul.f32 %v2652, %v2422
          %v2654 = vmul.f32 %v2653, %v2652
          %v2655 = vmul.f32 0.5, %v2654
          %v2656 = vsub.f32 1.5, %v2655
          %v2657 = vmul.f32 %v2652, %v2656
          %vm2658 = vweird.f32 %v2422
          %vm2659 = vweird.f32 %v2652
          %vm2660 = vmor %vm2658, %vm2659
          %v2661 = vsel %vm2660, %v2652, %v2657
          %v2662 = vrsqrt.pop %v2423
          %v2663 = vmul.f32 %v2662, %v2423
          %v2664 = vmul.f32 %v2663, %v2662
          %v2665 = vmul.f32 0.5, %v2664
          %v2666 = vsub.f32 1.5, %v2665
          %v2667 = vmul.f32 %v2662, %v2666
          %vm2668 = vweird.f32 %v2423
          %vm2669 = vweird.f32 %v2662
          %vm2670 = vmor %vm2668, %vm2669
          %v2671 = vsel %vm2670, %v2662, %v2667
          %v2672 = vrsqrt.pop %v2424
          %v2673 = vmul.f32 %v2672, %v2424
          %v2674 = vmul.f32 %v2673, %v2672
          %v2675 = vmul.f32 0.5, %v2674
          %v2676 = vsub.f32 1.5, %v2675
          %v2677 = vmul.f32 %v2672, %v2676
          %vm2678 = vweird.f32 %v2424
          %vm2679 = vweird.f32 %v2672
          %vm2680 = vmor %vm2678, %vm2679
          %v2681 = vsel %vm2680, %v2672, %v2677
          %v2682 = vrsqrt.pop %v2425
          %v2683 = vmul.f32 %v2682, %v2425
          %v2684 = vmul.f32 %v2683, %v2682
          %v2685 = vmul.f32 0.5, %v2684
          %v2686 = vsub.f32 1.5, %v2685
          %v2687 = vmul.f32 %v2682, %v2686
          %vm2688 = vweird.f32 %v2425
          %vm2689 = vweird.f32 %v2682
          %vm2690 = vmor %vm2688, %vm2689
          %v2691 = vsel %vm2690, %v2682, %v2687
          %v2692 = vrsqrt.pop %v2426
          %v2693 = vmul.f32 %v2692, %v2426
          %v2694 = vmul.f32 %v2693, %v2692
          %v2695 = vmul.f32 0.5, %v2694
          %v2696 = vsub.f32 1.5, %v2695
          %v2697 = vmul.f32 %v2692, %v2696
          %vm2698 = vweird.f32 %v2426
          %vm2699 = vweird.f32 %v2692
          %vm2700 = vmor %vm2698, %vm2699
          %v2701 = vsel %vm2700, %v2692, %v2697
          %v2702 = vrsqrt.pop %v2427
          %v2703 = vmul.f32 %v2702, %v2427
          %v2704 = vmul.f32 %v2703, %v2702
          %v2705 = vmul.f32 0.5, %v2704
          %v2706 = vsub.f32 1.5, %v2705
          %v2707 = vmul.f32 %v2702, %v2706
          %vm2708 = vweird.f32 %v2427
          %vm2709 = vweird.f32 %v2702
          %vm2710 = vmor %vm2708, %vm2709
          %v2711 = vsel %vm2710, %v2702, %v2707
          %v2712 = vrsqrt.pop %v2428
          %v2713 = vmul.f32 %v2712, %v2428
          %v2714 = vmul.f32 %v2713, %v2712
          %v2715 = vmul.f32 0.5, %v2714
          %v2716 = vsub.f32 1.5, %v2715
          %v2717 = vmul.f32 %v2712, %v2716
          %vm2718 = vweird.f32 %v2428
          %vm2719 = vweird.f32 %v2712
          %vm2720 = vmor %vm2718, %vm2719
          %v2721 = vsel %vm2720, %v2712, %v2717
          %v2722 = vrsqrt.pop %v2429
          %v2723 = vmul.f32 %v2722, %v2429
          %v2724 = vmul.f32 %v2723, %v2722
          %v2725 = vmul.f32 0.5, %v2724
          %v2726 = vsub.f32 1.5, %v2725
          %v2727 = vmul.f32 %v2722, %v2726
          %vm2728 = vweird.f32 %v2429
          %vm2729 = vweird.f32 %v2722
          %vm2730 = vmor %vm2728, %vm2729
          %v2731 = vsel %vm2730, %v2722, %v2727
          %v2732 = vrsqrt.pop %v2430
          %v2733 = vmul.f32 %v2732, %v2430
          %v2734 = vmul.f32 %v2733, %v2732
          %v2735 = vmul.f32 0.5, %v2734
          %v2736 = vsub.f32 1.5, %v2735
          %v2737 = vmul.f32 %v2732, %v2736
          %vm2738 = vweird.f32 %v2430
          %vm2739 = vweird.f32 %v2732
          %vm2740 = vmor %vm2738, %vm2739
          %v2741 = vsel %vm2740, %v2732, %v2737
          %v2742 = vrsqrt.pop %v2431
          %v2743 = vmul.f32 %v2742, %v2431
          %v2744 = vmul.f32 %v2743, %v2742
          %v2745 = vmul.f32 0.5, %v2744
          %v2746 = vsub.f32 1.5, %v2745
          %v2747 = vmul.f32 %v2742, %v2746
          %vm2748 = vweird.f32 %v2431
          %vm2749 = vweird.f32 %v2742
          %vm2750 = vmor %vm2748, %vm2749
          %v2751 = vsel %vm2750, %v2742, %v2747
          %v2752 = vld [vmem:[%s5] sm:$0x1]
          %v2754 = vperm.slane %v2752, 0
          %v2756 = vmul.f32 %v2441, %v2754
          %v2757 = vmul.f32 %v2451, %v2754
          %v2758 = vmul.f32 %v2461, %v2754
          %v2759 = vmul.f32 %v2471, %v2754
          %v2760 = vmul.f32 %v2481, %v2754
          %v2761 = vmul.f32 %v2491, %v2754
          %v2762 = vmul.f32 %v2501, %v2754
          %v2763 = vmul.f32 %v2511, %v2754
          %v2764 = vmul.f32 %v2521, %v2754
          %v2765 = vmul.f32 %v2531, %v2754
          %v2766 = vmul.f32 %v2541, %v2754
          %v2767 = vmul.f32 %v2551, %v2754
          %v2768 = vmul.f32 %v2561, %v2754
          %v2769 = vmul.f32 %v2571, %v2754
          %v2770 = vmul.f32 %v2581, %v2754
          %v2771 = vmul.f32 %v2591, %v2754
          %v2772 = vmul.f32 %v2601, %v2754
          %v2773 = vmul.f32 %v2611, %v2754
          %v2774 = vmul.f32 %v2621, %v2754
          %v2775 = vmul.f32 %v2631, %v2754
          %v2776 = vmul.f32 %v2641, %v2754
          %v2777 = vmul.f32 %v2651, %v2754
          %v2778 = vmul.f32 %v2661, %v2754
          %v2779 = vmul.f32 %v2671, %v2754
          %v2780 = vmul.f32 %v2681, %v2754
          %v2781 = vmul.f32 %v2691, %v2754
          %v2782 = vmul.f32 %v2701, %v2754
          %v2783 = vmul.f32 %v2711, %v2754
          %v2784 = vmul.f32 %v2721, %v2754
          %v2785 = vmul.f32 %v2731, %v2754
          %v2786 = vmul.f32 %v2741, %v2754
          %v2787 = vmul.f32 %v2751, %v2754
          %v2788 = vld [vmem:[%s6] sm:$0x1]
          %v2789 = vmul.f32 %v2272, %v2756
          %v2790 = vmul.f32 %v2273, %v2757
          %v2791 = vmul.f32 %v2274, %v2758
          %v2792 = vmul.f32 %v2275, %v2759
          %v2793 = vmul.f32 %v2276, %v2760
          %v2794 = vmul.f32 %v2277, %v2761
          %v2795 = vmul.f32 %v2278, %v2762
          %v2796 = vmul.f32 %v2279, %v2763
          %v2797 = vmul.f32 %v2280, %v2764
          %v2798 = vmul.f32 %v2281, %v2765
          %v2799 = vmul.f32 %v2282, %v2766
          %v2800 = vmul.f32 %v2283, %v2767
          %v2801 = vmul.f32 %v2284, %v2768
          %v2802 = vmul.f32 %v2285, %v2769
          %v2803 = vmul.f32 %v2286, %v2770
          %v2804 = vmul.f32 %v2287, %v2771
          %v2805 = vmul.f32 %v2288, %v2772
          %v2806 = vmul.f32 %v2289, %v2773
          %v2807 = vmul.f32 %v2290, %v2774
          %v2808 = vmul.f32 %v2291, %v2775
          %v2809 = vmul.f32 %v2292, %v2776
          %v2810 = vmul.f32 %v2293, %v2777
          %v2811 = vmul.f32 %v2294, %v2778
          %v2812 = vmul.f32 %v2295, %v2779
          %v2813 = vmul.f32 %v2296, %v2780
          %v2814 = vmul.f32 %v2297, %v2781
          %v2815 = vmul.f32 %v2298, %v2782
          %v2816 = vmul.f32 %v2299, %v2783
          %v2817 = vmul.f32 %v2300, %v2784
          %v2818 = vmul.f32 %v2301, %v2785
          %v2819 = vmul.f32 %v2302, %v2786
          %v2820 = vmul.f32 %v2303, %v2787
          %v2822 = vperm.slane %v2788, 0
          %v2824 = vsub.f32 %v2822, %v2789
          %v2825 = vsub.f32 %v2822, %v2790
          %v2826 = vsub.f32 %v2822, %v2791
          %v2827 = vsub.f32 %v2822, %v2792
          %v2828 = vsub.f32 %v2822, %v2793
          %v2829 = vsub.f32 %v2822, %v2794
          %v2830 = vsub.f32 %v2822, %v2795
          %v2831 = vsub.f32 %v2822, %v2796
          %v2832 = vsub.f32 %v2822, %v2797
          %v2833 = vsub.f32 %v2822, %v2798
          %v2834 = vsub.f32 %v2822, %v2799
          %v2835 = vsub.f32 %v2822, %v2800
          %v2836 = vsub.f32 %v2822, %v2801
          %v2837 = vsub.f32 %v2822, %v2802
          %v2838 = vsub.f32 %v2822, %v2803
          %v2839 = vsub.f32 %v2822, %v2804
          %v2840 = vsub.f32 %v2822, %v2805
          %v2841 = vsub.f32 %v2822, %v2806
          %v2842 = vsub.f32 %v2822, %v2807
          %v2843 = vsub.f32 %v2822, %v2808
          %v2844 = vsub.f32 %v2822, %v2809
          %v2845 = vsub.f32 %v2822, %v2810
          %v2846 = vsub.f32 %v2822, %v2811
          %v2847 = vsub.f32 %v2822, %v2812
          %v2848 = vsub.f32 %v2822, %v2813
          %v2849 = vsub.f32 %v2822, %v2814
          %v2850 = vsub.f32 %v2822, %v2815
          %v2851 = vsub.f32 %v2822, %v2816
          %v2852 = vsub.f32 %v2822, %v2817
          %v2853 = vsub.f32 %v2822, %v2818
          %v2854 = vsub.f32 %v2822, %v2819
          %v2855 = vsub.f32 %v2822, %v2820
          %v2856 = vmul.f32 %v2080, %v2756
          %v2857 = vmul.f32 %v2081, %v2757
          %v2858 = vmul.f32 %v2082, %v2758
          %v2859 = vmul.f32 %v2083, %v2759
          %v2860 = vmul.f32 %v2084, %v2760
          %v2861 = vmul.f32 %v2085, %v2761
          %v2862 = vmul.f32 %v2086, %v2762
          %v2863 = vmul.f32 %v2087, %v2763
          %v2864 = vmul.f32 %v2088, %v2764
          %v2865 = vmul.f32 %v2089, %v2765
          %v2866 = vmul.f32 %v2090, %v2766
          %v2867 = vmul.f32 %v2091, %v2767
          %v2868 = vmul.f32 %v2092, %v2768
          %v2869 = vmul.f32 %v2093, %v2769
          %v2870 = vmul.f32 %v2094, %v2770
          %v2871 = vmul.f32 %v2095, %v2771
          %v2872 = vmul.f32 %v2096, %v2772
          %v2873 = vmul.f32 %v2097, %v2773
          %v2874 = vmul.f32 %v2098, %v2774
          %v2875 = vmul.f32 %v2099, %v2775
          %v2876 = vmul.f32 %v2100, %v2776
          %v2877 = vmul.f32 %v2101, %v2777
          %v2878 = vmul.f32 %v2102, %v2778
          %v2879 = vmul.f32 %v2103, %v2779
          %v2880 = vmul.f32 %v2104, %v2780
          %v2881 = vmul.f32 %v2105, %v2781
          %v2882 = vmul.f32 %v2106, %v2782
          %v2883 = vmul.f32 %v2107, %v2783
          %v2884 = vmul.f32 %v2108, %v2784
          %v2885 = vmul.f32 %v2109, %v2785
          %v2886 = vmul.f32 %v2110, %v2786
          %v2887 = vmul.f32 %v2111, %v2787
          %v2888 = vadd.f32 %v2856, %v2824
          %v2889 = vadd.f32 %v2857, %v2825
          %v2890 = vadd.f32 %v2858, %v2826
          %v2891 = vadd.f32 %v2859, %v2827
          %v2892 = vadd.f32 %v2860, %v2828
          %v2893 = vadd.f32 %v2861, %v2829
          %v2894 = vadd.f32 %v2862, %v2830
          %v2895 = vadd.f32 %v2863, %v2831
          %v2896 = vadd.f32 %v2864, %v2832
          %v2897 = vadd.f32 %v2865, %v2833
          %v2898 = vadd.f32 %v2866, %v2834
          %v2899 = vadd.f32 %v2867, %v2835
          %v2900 = vadd.f32 %v2868, %v2836
          %v2901 = vadd.f32 %v2869, %v2837
          %v2902 = vadd.f32 %v2870, %v2838
          %v2903 = vadd.f32 %v2871, %v2839
          %v2904 = vadd.f32 %v2872, %v2840
          %v2905 = vadd.f32 %v2873, %v2841
          %v2906 = vadd.f32 %v2874, %v2842
          %v2907 = vadd.f32 %v2875, %v2843
          %v2908 = vadd.f32 %v2876, %v2844
          %v2909 = vadd.f32 %v2877, %v2845
          %v2910 = vadd.f32 %v2878, %v2846
          %v2911 = vadd.f32 %v2879, %v2847
          %v2912 = vadd.f32 %v2880, %v2848
          %v2913 = vadd.f32 %v2881, %v2849
          %v2914 = vadd.f32 %v2882, %v2850
          %v2915 = vadd.f32 %v2883, %v2851
          %v2916 = vadd.f32 %v2884, %v2852
          %v2917 = vadd.f32 %v2885, %v2853
          %v2918 = vadd.f32 %v2886, %v2854
          %v2919 = vadd.f32 %v2887, %v2855
          %v2920 = vpack.c.bf16 %v2888, %v2888
          %v2921 = vpack.c.bf16 %v2889, %v2889
          %v2922 = vpack.c.bf16 %v2890, %v2890
          %v2923 = vpack.c.bf16 %v2891, %v2891
          %v2924 = vpack.c.bf16 %v2892, %v2892
          %v2925 = vpack.c.bf16 %v2893, %v2893
          %v2926 = vpack.c.bf16 %v2894, %v2894
          %v2927 = vpack.c.bf16 %v2895, %v2895
          %v2928 = vpack.c.bf16 %v2896, %v2896
          %v2929 = vpack.c.bf16 %v2897, %v2897
          %v2930 = vpack.c.bf16 %v2898, %v2898
          %v2931 = vpack.c.bf16 %v2899, %v2899
          %v2932 = vpack.c.bf16 %v2900, %v2900
          %v2933 = vpack.c.bf16 %v2901, %v2901
          %v2934 = vpack.c.bf16 %v2902, %v2902
          %v2935 = vpack.c.bf16 %v2903, %v2903
          %v2936 = vpack.c.bf16 %v2904, %v2904
          %v2937 = vpack.c.bf16 %v2905, %v2905
          %v2938 = vpack.c.bf16 %v2906, %v2906
          %v2939 = vpack.c.bf16 %v2907, %v2907
          %v2940 = vpack.c.bf16 %v2908, %v2908
          %v2941 = vpack.c.bf16 %v2909, %v2909
          %v2942 = vpack.c.bf16 %v2910, %v2910
          %v2943 = vpack.c.bf16 %v2911, %v2911
          %v2944 = vpack.c.bf16 %v2912, %v2912
          %v2945 = vpack.c.bf16 %v2913, %v2913
          %v2946 = vpack.c.bf16 %v2914, %v2914
          %v2947 = vpack.c.bf16 %v2915, %v2915
          %v2948 = vpack.c.bf16 %v2916, %v2916
          %v2949 = vpack.c.bf16 %v2917, %v2917
          %v2950 = vpack.c.bf16 %v2918, %v2918
          %v2951 = vpack.c.bf16 %v2919, %v2919
          %2952 = vst [vmem:[%s330] sm:$0xf] %v2920
          %2953 = vst [vmem:[%s330 + $0x4] sm:$0xf] %v2921
          %2954 = vst [vmem:[%s330 + $0x8] sm:$0xf] %v2922
          %2955 = vst [vmem:[%s330 + $0xc] sm:$0xf] %v2923
          %2956 = vst [vmem:[%s330 + $0x10] sm:$0xf] %v2924
          %2957 = vst [vmem:[%s330 + $0x14] sm:$0xf] %v2925
          %2958 = vst [vmem:[%s330 + $0x18] sm:$0xf] %v2926
          %2959 = vst [vmem:[%s330 + $0x1c] sm:$0xf] %v2927
          %2960 = vst [vmem:[%s330 + $0x20] sm:$0xf] %v2928
          %2961 = vst [vmem:[%s330 + $0x24] sm:$0xf] %v2929
          %2962 = vst [vmem:[%s330 + $0x28] sm:$0xf] %v2930
          %2963 = vst [vmem:[%s330 + $0x2c] sm:$0xf] %v2931
          %2964 = vst [vmem:[%s330 + $0x30] sm:$0xf] %v2932
          %2965 = vst [vmem:[%s330 + $0x34] sm:$0xf] %v2933
          %2966 = vst [vmem:[%s330 + $0x38] sm:$0xf] %v2934
          %2967 = vst [vmem:[%s330 + $0x3c] sm:$0xf] %v2935
          %2968 = vst [vmem:[%s330 + $0x40] sm:$0xf] %v2936
          %2969 = vst [vmem:[%s330 + $0x44] sm:$0xf] %v2937
          %2970 = vst [vmem:[%s330 + $0x48] sm:$0xf] %v2938
          %2971 = vst [vmem:[%s330 + $0x4c] sm:$0xf] %v2939
          %2972 = vst [vmem:[%s330 + $0x50] sm:$0xf] %v2940
          %2973 = vst [vmem:[%s330 + $0x54] sm:$0xf] %v2941
          %2974 = vst [vmem:[%s330 + $0x58] sm:$0xf] %v2942
          %2975 = vst [vmem:[%s330 + $0x5c] sm:$0xf] %v2943
          %2976 = vst [vmem:[%s330 + $0x60] sm:$0xf] %v2944
          %2977 = vst [vmem:[%s330 + $0x64] sm:$0xf] %v2945
          %2978 = vst [vmem:[%s330 + $0x68] sm:$0xf] %v2946
          %2979 = vst [vmem:[%s330 + $0x6c] sm:$0xf] %v2947
          %2980 = vst [vmem:[%s330 + $0x70] sm:$0xf] %v2948
          %2981 = vst [vmem:[%s330 + $0x74] sm:$0xf] %v2949
          %2982 = vst [vmem:[%s330 + $0x78] sm:$0xf] %v2950
          %2983 = vst [vmem:[%s330 + $0x7c] sm:$0xf] %v2951
        $region56: #{poswise_ffn.1} parent=47 // pred_fallthru
          _
        %s2984 = sand.u32 %s208, 1
        %s2985 = scalar_lea.sflag [#allocation4], %s2984
        %s2986 = sand.u32 %s208, 1
        %s2987 = smul.addr %s2986, 128
        %s2988 = scalar_lea.vmem [#allocation3], %s2987
        // Predicated region
        $region57: #{poswise_ffn.1} parent=47 // pred_check
          %p2989 = pneg %p218
        $region58: #{poswise_ffn.1} parent=47 // pred_check_branch
          %2991 = sbr.rel (%p2989) target = $region60
        $region59: #{poswise_ffn.1} parent=47 // pred_region
          %s2992 = smul.u32 32, %s25
          %2994 = vsyncadd %s2985, 0
          %s2995 = smul.addr %s2992, 4
          %s2996 = scalar_lea.hbm %s7, %s2995
          %s2997 = sshll.u32 %s2988, 4
          %s2998 = int_to_ptr.vmem [resolvable:$true] %s2997
          %s2999 = sshll.u32 %s2996, 4
          %s3000 = int_to_ptr.hbm [resolvable:$true] %s2999
          %3005 = dma.vmem_to_hbm [thread:$0]  %s2998, 2048, %s3000, %s2985, 64, 64, 4
        $region60: #{poswise_ffn.1} parent=47 // pred_fallthru
          _
      $region48: #{poswise_ffn.1} parent=5 // pred_fallthru
        _
      %p3006 = scmp.le.s32.totalorder 2, %s16
      // Predicated region
      $region61: #{poswise_ffn.1} parent=5 // pred_check
        %p3007 = pneg %p3006
      $region62: #{poswise_ffn.1} parent=5 // pred_check_branch
        %3009 = sbr.rel (%p3007) target = $region64
      $region63: #{poswise_ffn.1} parent=5 // pred_region
        %s3010 = ssub.s32 %s16, 2
        // Predicated region
        $region65: #{poswise_ffn.1} parent=63 // pred_check
          %p3011 = pneg %p224
        $region66: #{poswise_ffn.1} parent=63 // pred_check_branch
          %3013 = sbr.rel (%p3011) target = $region68
        $region67: #{poswise_ffn.1} parent=63 // pred_region
          %s3014 = sand.u32 %s209, 1
          %s3015 = scalar_lea.sflag [#allocation4], %s3014
          %s3016 = sand.u32 %s209, 1
          %s3017 = smul.addr %s3016, 128
          %s3018 = scalar_lea.vmem [#allocation3], %s3017
          %3020 = dma.done %s3015, 2048
        $region68: #{poswise_ffn.1} parent=63 // pred_fallthru
          _
      $region64: #{poswise_ffn.1} parent=5 // pred_fallthru
        _
    $region6: #{poswise_ffn.1} parent=1 // loop_footer
      %s20 = sadd.s32 1, %s16
    $region7: #{poswise_ffn.1} parent=1 // loop_footer_branch
      %15 = sbr.rel target = $region3
    $region8: #{poswise_ffn.1} parent=1 // loop_exit
      _
    %3021 = vsyncpa [#allocation4], 1
    %s3022 = scalar_lea.sflag [#allocation4], 1
    %3023 = vsyncpa %s3022, 1

</llo_original>
